<compile_context>
chip_gen: v7x
topology: tpu7x:2x2x1
jax: 0.10.0
libtpu: 0.0.40
codegen_flags: <defaults>
</compile_context>

<pallas_src>
import functools

import jax
import jax.numpy as jnp
from jax.experimental import pallas as pl
from jax.experimental.pallas import tpu as pltpu


def _bottleneck_kernel(col_ref, x_ref, xt_ref, xb_ref,
                       w1_ref, b1_ref, w2_ref, b2_ref, w3_ref, b3_ref,
                       o_ref, *, W, TH, Wpad, n_row_tiles):
    """conv1x1+bn+relu -> conv3x3(9 tap dots)+bn+relu -> conv1x1+bn -> +id -> relu."""
    f32 = jnp.float32
    bf16 = jnp.bfloat16
    P = TH * W                 # lanes of the core tile (TH rows)
    L = P + 2 * Wpad           # lanes of the halo-extended slab
    r = pl.program_id(1)       # row-tile index

    x_core = x_ref[0]                                        # (Cin, P) bf16

    # ---- conv1 (1x1, BN scale folded into w1) + shift + relu ----
    def conv1(xs):
        y = jnp.dot(w1_ref[...], xs, preferred_element_type=f32)
        return jnp.maximum(y + b1_ref[...], 0.0)

    t1 = conv1(x_core)                                       # (width, P) f32
    # Halo rows (row just above / below this tile), recomputed from x via the
    # pointwise conv1.  Zeroed where they fall outside the image so they act as
    # conv2's zero padding.
    t1_top = jnp.where(r > 0, conv1(xt_ref[0]), 0.0)         # (width, Wpad)
    t1_bot = jnp.where(r < n_row_tiles - 1, conv1(xb_ref[0]), 0.0)

    # [halo-above | core | halo-below] along the lane axis; core starts at Wpad.
    t1_ext = jnp.concatenate([t1_top, t1, t1_bot], axis=1)   # (width, L) f32

    # Column-edge masks (row edges handled by the halo).  col_ref holds p % W,
    # precomputed on the host -> no vector div/mod in the kernel.
    col = col_ref[...]                                       # (1, P) int32
    left_ok = col >= 1
    right_ok = col <= W - 2

    # ---- conv2 (3x3, stride=1, pad=1) as 9 accumulating tap matmuls ----
    # No im2col slab is materialised; peak VMEM stays O(width * L).
    t2 = None
    for ky, sy in enumerate((-1, 0, 1)):
        for kx, sx in enumerate((-1, 0, 1)):
            if sy == 0 and sx == 0:
                tap = t1
            else:
                shift = Wpad + sy * W + sx     # ext index feeding core position 0
                tap = pltpu.roll(t1_ext, shift=(-shift) % L, axis=1)[:, :P]
            if sx == -1:
                tap = jnp.where(left_ok, tap, 0.0)
            elif sx == 1:
                tap = jnp.where(right_ok, tap, 0.0)
            d = jnp.dot(w2_ref[3 * ky + kx], tap.astype(bf16),
                        preferred_element_type=f32)
            t2 = d if t2 is None else t2 + d
    t2 = jnp.maximum(t2 + b2_ref[...], 0.0)                  # (width, P) f32

    # ---- conv3 (1x1, BN folded) + shift + residual + relu ----
    t3 = jnp.dot(w3_ref[...], t2.astype(bf16), preferred_element_type=f32)
    t3 = t3 + b3_ref[...] + x_core.astype(f32)               # identity (Cin == Cout)
    o_ref[0] = jnp.maximum(t3, 0.0).astype(o_ref.dtype)


def _round_up(x, m):
    return -(-x // m) * m


def _vmem_bytes_estimate(Cin, Cout, width, P, Wpad):
    """Rough per-step VMEM need: double-buffered blocks + live in-kernel values."""
    bf, f4 = 2, 4
    L = P + 2 * Wpad
    io = 2 * (Cin * P * bf + 2 * Cin * Wpad * bf + Cout * P * bf + P * 4
              + (width * Cin + 9 * width * width + Cout * width) * bf
              + (2 * width + Cout) * f4)
    live = 3 * width * L * f4 + width * P * (f4 + bf) + Cout * P * f4
    return io + live


def _choose_row_tile(H, W, Cin, Cout, width, row_tile, budget_bytes=20 * 2**20):
    """Pick rows-per-tile TH and the halo block lane width Wpad."""
    HW = H * W
    Wpad0 = _round_up(W, 128)
    cands = [(t, Wpad0) for t in range(1, H)
             if H % t == 0 and (t * W) % Wpad0 == 0]
    cands.append((H, min(Wpad0, HW)))          # whole image: always valid fallback
    if row_tile is not None:
        for t, wp in cands:
            if t == row_tile:
                return t, wp
        raise ValueError(
            f"row_tile={row_tile} invalid for H={H}, W={W}: need H % row_tile == 0 "
            f"and (row_tile*W) % {Wpad0} == 0, or row_tile == H.")
    best = cands[0]
    for t, wp in cands:                         # ascending: largest tile under budget
        if _vmem_bytes_estimate(Cin, Cout, width, t * W, wp) <= budget_bytes:
            best = (t, wp)
    return best


def bottleneck_forward(x_nchw, kernel_params, row_tile=None):
    """Fused Bottleneck forward (stride=1, downsample=None, eval-mode BN folded).

    x_nchw: (B, Cin, H, W) float32 or bfloat16.  Returns (B, Cout, H, W) bfloat16.
    """
    w1, b1, w2, b2, w3, b3 = kernel_params
    B, Cin, H, W = x_nchw.shape
    width = w1.shape[0]
    Cout = w3.shape[0]
    assert w1.shape[1] == Cin
    assert Cout == Cin, "downsample=None requires inplanes == planes*expansion"
    HW = H * W

    TH, Wpad = _choose_row_tile(H, W, Cin, Cout, width, row_tile)
    P = TH * W
    n_row_tiles = H // TH
    kk = P // Wpad
    n_wblk = HW // Wpad

    # bf16 at the HBM boundary halves the traffic of the two big tensors
    # (no-op if the producer already runs in bf16).
    x = x_nchw.reshape(B, Cin, HW).astype(jnp.bfloat16)
    # Per-tile column index (p % W): identical for every row tile.
    col_ids = (jnp.arange(P, dtype=jnp.int32) % W).reshape(1, P)

    est = _vmem_bytes_estimate(Cin, Cout, width, P, Wpad)
    vmem_limit = int(min(max(2 * est, 32 * 2**20), 48 * 2**20))  # never all of v7x VMEM

    kernel = functools.partial(_bottleneck_kernel, W=W, TH=TH, Wpad=Wpad,
                               n_row_tiles=n_row_tiles)
    out = pl.pallas_call(
        kernel,
        out_shape=jax.ShapeDtypeStruct((B, Cout, HW), jnp.bfloat16),
        grid_spec=pltpu.PrefetchScalarGridSpec(
            num_scalar_prefetch=0,
            grid=(B, n_row_tiles),
            in_specs=[
                pl.BlockSpec((1, P), lambda b, r: (0, 0)),                 # col ids
                pl.BlockSpec((1, Cin, P), lambda b, r: (b, 0, r)),         # x core rows
                pl.BlockSpec((1, Cin, Wpad),                               # halo above
                             lambda b, r: (b, 0, jnp.maximum(r * kk - 1, 0))),
                pl.BlockSpec((1, Cin, Wpad),                               # halo below
                             lambda b, r: (b, 0, jnp.minimum((r + 1) * kk, n_wblk - 1))),
                pl.BlockSpec((width, Cin), lambda b, r: (0, 0)),           # w1 (BN folded)
                pl.BlockSpec((width, 1), lambda b, r: (0, 0)),             # bn1 shift
                pl.BlockSpec((9, width, width), lambda b, r: (0, 0, 0)),   # w2 per tap
                pl.BlockSpec((width, 1), lambda b, r: (0, 0)),             # bn2 shift
                pl.BlockSpec((Cout, width), lambda b, r: (0, 0)),          # w3 (BN folded)
                pl.BlockSpec((Cout, 1), lambda b, r: (0, 0)),              # bn3 shift
            ],
            out_specs=pl.BlockSpec((1, Cout, P), lambda b, r: (b, 0, r)),
        ),
        compiler_params=pltpu.CompilerParams(
            dimension_semantics=("parallel", "parallel"),
            vmem_limit_bytes=vmem_limit,
        ),
    )(col_ids, x, x, x, w1, b1, w2, b2, w3, b3)

    return out.reshape(B, Cout, H, W)


def init_params(key, inplanes, planes, base_width=64, groups=1, eps=1e-5):
    """Synthetic parameters in PyTorch layout + eval-mode BN statistics."""
    width = int(planes * (base_width / 64.0)) * groups
    cout = planes * 4  # expansion = 4
    keys = jax.random.split(key, 15)

    def bn(kw, kb, km, kv, c):
        gamma = 1.0 + 0.1 * jax.random.normal(kw, (c,), jnp.float32)
        beta = 0.1 * jax.random.normal(kb, (c,), jnp.float32)
        mean = 0.1 * jax.random.normal(km, (c,), jnp.float32)
        var = jnp.abs(jax.random.normal(kv, (c,), jnp.float32)) + 0.5
        scale = gamma / jnp.sqrt(var + eps)     # folded eval-mode BN
        shift = beta - mean * scale
        return scale, shift

    w1 = 0.1 * jax.random.normal(keys[0], (width, inplanes, 1, 1), jnp.float32)
    s1, b1 = bn(keys[1], keys[2], keys[3], keys[4], width)
    w2 = 0.1 * jax.random.normal(keys[5], (width, width, 3, 3), jnp.float32)
    s2, b2 = bn(keys[6], keys[7], keys[8], keys[9], width)
    w3 = 0.1 * jax.random.normal(keys[10], (cout, width, 1, 1), jnp.float32)
    s3, b3 = bn(keys[11], keys[12], keys[13], keys[14], cout)
    return (w1, s1, b1, w2, s2, b2, w3, s3, b3)


def fold_params(raw):
    """Fold BN scales into the conv weights, cast matmul operands to bf16
    (accumulation stays f32 in-kernel) and lay the 3x3 weight out as
    (tap=ky*3+kx, out_ch, in_ch) for the per-tap accumulating dots."""
    w1, s1, b1, w2, s2, b2, w3, s3, b3 = raw
    width = w1.shape[0]
    cout = w3.shape[0]
    bf16 = jnp.bfloat16
    w1m = (w1[:, :, 0, 0] * s1[:, None]).astype(bf16)                   # (width, Cin)
    w2s = w2 * s2[:, None, None, None]
    w2m = jnp.transpose(w2s, (2, 3, 0, 1)).reshape(9, width, width).astype(bf16)
    w3m = (w3[:, :, 0, 0] * s3[:, None]).astype(bf16)                   # (Cout, width)
    return (w1m, b1.reshape(width, 1).astype(jnp.float32),
            w2m, b2.reshape(width, 1).astype(jnp.float32),
            w3m, b3.reshape(cout, 1).astype(jnp.float32))


def bottleneck_reference(x, raw):
    """Pure-JAX f32 reference matching the PyTorch module (eval-mode BN)."""
    w1, s1, b1, w2, s2, b2, w3, s3, b3 = raw
    dn = ("NCHW", "OIHW", "NCHW")
    bn = lambda y, s, b: y * s[None, :, None, None] + b[None, :, None, None]
    y = jax.lax.conv_general_dilated(x, w1, (1, 1), "VALID", dimension_numbers=dn)
    y = jax.nn.relu(bn(y, s1, b1))
    y = jax.lax.conv_general_dilated(y, w2, (1, 1), ((1, 1), (1, 1)),
                                     dimension_numbers=dn)
    y = jax.nn.relu(bn(y, s2, b2))
    y = jax.lax.conv_general_dilated(y, w3, (1, 1), "VALID", dimension_numbers=dn)
    y = bn(y, s3, b3)
    return jax.nn.relu(y + x)


if __name__ == "__main__":
    key = jax.random.PRNGKey(0)
    kx_, kp_ = jax.random.split(key)

    planes = 4
    inplanes = planes * 4  # = planes * expansion so the identity add is valid
    B, H, W = 2, 16, 16

    x = jax.random.normal(kx_, (B, inplanes, H, W), jnp.float32)
    raw = init_params(kp_, inplanes, planes)
    kparams = fold_params(raw)
    ref = bottleneck_reference(x, raw)

    # Run both the row-tiled path (2 tiles of 8 rows -> exercises the halo
    # blocks across a real tile boundary) and the auto-picked whole-image path.
    for row_tile in (8, None):
        out = jax.block_until_ready(bottleneck_forward(x, kparams, row_tile=row_tile))
        assert out.shape == (B, planes * 4, H, W), out.shape
        out_f32 = out.astype(jnp.float32)
        assert bool(jnp.all(jnp.isfinite(out_f32)))
        assert bool(jnp.all(out_f32 >= 0.0))  # final ReLU
        # bf16 I/O + bf16 matmul operands vs f32 reference (relaxed tolerance).
        max_err = float(jnp.max(jnp.abs(out_f32 - ref)))
        assert max_err < 0.1, f"row_tile={row_tile}: max abs err {max_err}"

    print("KERNEL_OK")
</pallas_src>

<mosaic_0001>
module attributes {stable_mosaic.version = 11 : i64} {
  func.func @_bottleneck_kernel(%arg0: i32, %arg1: i32, %arg2: memref<1x128xi32, #tpu.memory_space<vmem>>, %arg3: memref<1x16x128xbf16, #tpu.memory_space<vmem>>, %arg4: memref<1x16x128xbf16, #tpu.memory_space<vmem>>, %arg5: memref<1x16x128xbf16, #tpu.memory_space<vmem>>, %arg6: memref<4x16xbf16, #tpu.memory_space<vmem>>, %arg7: memref<4x1xf32, #tpu.memory_space<vmem>>, %arg8: memref<9x4x4xbf16, #tpu.memory_space<vmem>>, %arg9: memref<4x1xf32, #tpu.memory_space<vmem>>, %arg10: memref<16x4xbf16, #tpu.memory_space<vmem>>, %arg11: memref<16x1xf32, #tpu.memory_space<vmem>>, %arg12: memref<1x16x128xbf16, #tpu.memory_space<vmem>>) attributes {dimension_semantics = [#tpu.dimension_semantics<parallel>, #tpu.dimension_semantics<parallel>], iteration_bounds = array<i64: 2, 2>, scalar_prefetch = 0 : i64, scratch_operands = 0 : i64, tpu.core_type = #tpu.core_type<tc>, window_params = [{pipeline_mode = #tpu.pipeline_mode<synchronous>, transform_indices = @transform_0, window_bounds = array<i64: 1, 128>}, {transform_indices = @transform_1, window_bounds = array<i64: 1, 16, 128>}, {transform_indices = @transform_2, window_bounds = array<i64: 1, 16, 128>}, {transform_indices = @transform_3, window_bounds = array<i64: 1, 16, 128>}, {pipeline_mode = #tpu.pipeline_mode<synchronous>, transform_indices = @transform_4, window_bounds = array<i64: 4, 16>}, {pipeline_mode = #tpu.pipeline_mode<synchronous>, transform_indices = @transform_5, window_bounds = array<i64: 4, 1>}, {pipeline_mode = #tpu.pipeline_mode<synchronous>, transform_indices = @transform_6, window_bounds = array<i64: 9, 4, 4>}, {pipeline_mode = #tpu.pipeline_mode<synchronous>, transform_indices = @transform_7, window_bounds = array<i64: 4, 1>}, {pipeline_mode = #tpu.pipeline_mode<synchronous>, transform_indices = @transform_8, window_bounds = array<i64: 16, 4>}, {pipeline_mode = #tpu.pipeline_mode<synchronous>, transform_indices = @transform_9, window_bounds = array<i64: 16, 1>}, {transform_indices = @transform_10, window_bounds = array<i64: 1, 16, 128>}]} {
    %c0 = arith.constant 0 : index
    %c0_0 = arith.constant 0 : index
    %c0_1 = arith.constant 0 : index
    %0 = vector.load %arg3[%c0, %c0_0, %c0_1] : memref<1x16x128xbf16, #tpu.memory_space<vmem>>, vector<1x16x128xbf16>
    %1 = vector.shape_cast %0 : vector<1x16x128xbf16> to vector<16x128xbf16>
    %c0_2 = arith.constant 0 : index
    %c0_3 = arith.constant 0 : index
    %2 = vector.load %arg6[%c0_2, %c0_3] : memref<4x16xbf16, #tpu.memory_space<vmem>>, vector<4x16xbf16>
    %cst = arith.constant dense<0.000000e+00> : vector<4x128xf32>
    %3 = tpu.matmul %2, %1, %cst {dimension_numbers = #tpu.dot_dimension_numbers<[1], [0], [0], [1], [0, 0, 1, 1], [], []>} : vector<4x16xbf16>, vector<16x128xbf16>, vector<4x128xf32> -> vector<4x128xf32>
    %c0_4 = arith.constant 0 : index
    %c0_5 = arith.constant 0 : index
    %4 = vector.load %arg7[%c0_4, %c0_5] : memref<4x1xf32, #tpu.memory_space<vmem>>, vector<4x1xf32>
    %5 = vector.broadcast %4 : vector<4x1xf32> to vector<4x128xf32>
    %6 = arith.addf %3, %5 : vector<4x128xf32>
    %cst_6 = arith.constant 0.000000e+00 : f32
    %7 = vector.broadcast %cst_6 : f32 to vector<4x128xf32>
    %8 = arith.maximumf %6, %7 : vector<4x128xf32>
    %c0_i32 = arith.constant 0 : i32
    %9 = arith.cmpi sgt, %arg1, %c0_i32 : i32
    %c0_7 = arith.constant 0 : index
    %c0_8 = arith.constant 0 : index
    %c0_9 = arith.constant 0 : index
    %10 = vector.load %arg4[%c0_7, %c0_8, %c0_9] : memref<1x16x128xbf16, #tpu.memory_space<vmem>>, vector<1x16x128xbf16>
    %11 = vector.shape_cast %10 : vector<1x16x128xbf16> to vector<16x128xbf16>
    %c0_10 = arith.constant 0 : index
    %c0_11 = arith.constant 0 : index
    %12 = vector.load %arg6[%c0_10, %c0_11] : memref<4x16xbf16, #tpu.memory_space<vmem>>, vector<4x16xbf16>
    %cst_12 = arith.constant dense<0.000000e+00> : vector<4x128xf32>
    %13 = tpu.matmul %12, %11, %cst_12 {dimension_numbers = #tpu.dot_dimension_numbers<[1], [0], [0], [1], [0, 0, 1, 1], [], []>} : vector<4x16xbf16>, vector<16x128xbf16>, vector<4x128xf32> -> vector<4x128xf32>
    %c0_13 = arith.constant 0 : index
    %c0_14 = arith.constant 0 : index
    %14 = vector.load %arg7[%c0_13, %c0_14] : memref<4x1xf32, #tpu.memory_space<vmem>>, vector<4x1xf32>
    %15 = vector.broadcast %14 : vector<4x1xf32> to vector<4x128xf32>
    %16 = arith.addf %13, %15 : vector<4x128xf32>
    %cst_15 = arith.constant 0.000000e+00 : f32
    %17 = vector.broadcast %cst_15 : f32 to vector<4x128xf32>
    %18 = arith.maximumf %16, %17 : vector<4x128xf32>
    %cst_16 = arith.constant 0.000000e+00 : f32
    %19 = vector.broadcast %cst_16 : f32 to vector<4x128xf32>
    %20 = arith.select %9, %18, %19 : vector<4x128xf32>
    %c1_i32 = arith.constant 1 : i32
    %21 = arith.cmpi slt, %arg1, %c1_i32 : i32
    %c0_17 = arith.constant 0 : index
    %c0_18 = arith.constant 0 : index
    %c0_19 = arith.constant 0 : index
    %22 = vector.load %arg5[%c0_17, %c0_18, %c0_19] : memref<1x16x128xbf16, #tpu.memory_space<vmem>>, vector<1x16x128xbf16>
    %23 = vector.shape_cast %22 : vector<1x16x128xbf16> to vector<16x128xbf16>
    %c0_20 = arith.constant 0 : index
    %c0_21 = arith.constant 0 : index
    %24 = vector.load %arg6[%c0_20, %c0_21] : memref<4x16xbf16, #tpu.memory_space<vmem>>, vector<4x16xbf16>
    %cst_22 = arith.constant dense<0.000000e+00> : vector<4x128xf32>
    %25 = tpu.matmul %24, %23, %cst_22 {dimension_numbers = #tpu.dot_dimension_numbers<[1], [0], [0], [1], [0, 0, 1, 1], [], []>} : vector<4x16xbf16>, vector<16x128xbf16>, vector<4x128xf32> -> vector<4x128xf32>
    %c0_23 = arith.constant 0 : index
    %c0_24 = arith.constant 0 : index
    %26 = vector.load %arg7[%c0_23, %c0_24] : memref<4x1xf32, #tpu.memory_space<vmem>>, vector<4x1xf32>
    %27 = vector.broadcast %26 : vector<4x1xf32> to vector<4x128xf32>
    %28 = arith.addf %25, %27 : vector<4x128xf32>
    %cst_25 = arith.constant 0.000000e+00 : f32
    %29 = vector.broadcast %cst_25 : f32 to vector<4x128xf32>
    %30 = arith.maximumf %28, %29 : vector<4x128xf32>
    %cst_26 = arith.constant 0.000000e+00 : f32
    %31 = vector.broadcast %cst_26 : f32 to vector<4x128xf32>
    %32 = arith.select %21, %30, %31 : vector<4x128xf32>
    %33 = tpu.concatenate %20, %8, %32 in 1 : vector<4x128xf32>, vector<4x128xf32>, vector<4x128xf32> -> vector<4x384xf32>
    %c0_27 = arith.constant 0 : index
    %c0_28 = arith.constant 0 : index
    %34 = vector.load %arg2[%c0_27, %c0_28] : memref<1x128xi32, #tpu.memory_space<vmem>>, vector<1x128xi32>
    %c1_i32_29 = arith.constant 1 : i32
    %35 = vector.broadcast %c1_i32_29 : i32 to vector<1x128xi32>
    %36 = arith.cmpi sge, %34, %35 : vector<1x128xi32>
    %c14_i32 = arith.constant 14 : i32
    %37 = vector.broadcast %c14_i32 : i32 to vector<1x128xi32>
    %38 = arith.cmpi sle, %34, %37 : vector<1x128xi32>
    %c273_i32 = arith.constant 273 : i32
    %39 = tpu.dynamic_rotate %33 by %c273_i32 dim 1 : vector<4x384xf32>, i32 -> vector<4x384xf32>
    %40 = vector.extract_strided_slice %39 {offsets = [0, 0], sizes = [4, 128], strides = [1, 1]} : vector<4x384xf32> to vector<4x128xf32>
    %cst_30 = arith.constant 0.000000e+00 : f32
    %41 = vector.shape_cast %36 : vector<1x128xi1> to vector<1x128xi1>
    %42 = vector.broadcast %41 : vector<1x128xi1> to vector<4x128xi1>
    %43 = vector.broadcast %cst_30 : f32 to vector<4x128xf32>
    %44 = arith.select %42, %40, %43 : vector<4x128xi1>, vector<4x128xf32>
    %c0_31 = arith.constant 0 : index
    %c0_32 = arith.constant 0 : index
    %c0_33 = arith.constant 0 : index
    %45 = vector.load %arg8[%c0_31, %c0_32, %c0_33] : memref<9x4x4xbf16, #tpu.memory_space<vmem>>, vector<1x4x4xbf16>
    %46 = vector.shape_cast %45 : vector<1x4x4xbf16> to vector<4x4xbf16>
    %47 = arith.truncf %44 : vector<4x128xf32> to vector<4x128xbf16>
    %cst_34 = arith.constant dense<0.000000e+00> : vector<4x128xf32>
    %48 = tpu.matmul %46, %47, %cst_34 {dimension_numbers = #tpu.dot_dimension_numbers<[1], [0], [0], [1], [0, 0, 1, 1], [], []>} : vector<4x4xbf16>, vector<4x128xbf16>, vector<4x128xf32> -> vector<4x128xf32>
    %c272_i32 = arith.constant 272 : i32
    %49 = tpu.dynamic_rotate %33 by %c272_i32 dim 1 : vector<4x384xf32>, i32 -> vector<4x384xf32>
    %50 = vector.extract_strided_slice %49 {offsets = [0, 0], sizes = [4, 128], strides = [1, 1]} : vector<4x384xf32> to vector<4x128xf32>
    %c1 = arith.constant 1 : index
    %c0_35 = arith.constant 0 : index
    %c0_36 = arith.constant 0 : index
    %51 = vector.load %arg8[%c1, %c0_35, %c0_36] : memref<9x4x4xbf16, #tpu.memory_space<vmem>>, vector<1x4x4xbf16>
    %52 = vector.shape_cast %51 : vector<1x4x4xbf16> to vector<4x4xbf16>
    %53 = arith.truncf %50 : vector<4x128xf32> to vector<4x128xbf16>
    %cst_37 = arith.constant dense<0.000000e+00> : vector<4x128xf32>
    %54 = tpu.matmul %52, %53, %cst_37 {dimension_numbers = #tpu.dot_dimension_numbers<[1], [0], [0], [1], [0, 0, 1, 1], [], []>} : vector<4x4xbf16>, vector<4x128xbf16>, vector<4x128xf32> -> vector<4x128xf32>
    %55 = arith.addf %48, %54 : vector<4x128xf32>
    %c271_i32 = arith.constant 271 : i32
    %56 = tpu.dynamic_rotate %33 by %c271_i32 dim 1 : vector<4x384xf32>, i32 -> vector<4x384xf32>
    %57 = vector.extract_strided_slice %56 {offsets = [0, 0], sizes = [4, 128], strides = [1, 1]} : vector<4x384xf32> to vector<4x128xf32>
    %cst_38 = arith.constant 0.000000e+00 : f32
    %58 = vector.shape_cast %38 : vector<1x128xi1> to vector<1x128xi1>
    %59 = vector.broadcast %58 : vector<1x128xi1> to vector<4x128xi1>
    %60 = vector.broadcast %cst_38 : f32 to vector<4x128xf32>
    %61 = arith.select %59, %57, %60 : vector<4x128xi1>, vector<4x128xf32>
    %c2 = arith.constant 2 : index
    %c0_39 = arith.constant 0 : index
    %c0_40 = arith.constant 0 : index
    %62 = vector.load %arg8[%c2, %c0_39, %c0_40] : memref<9x4x4xbf16, #tpu.memory_space<vmem>>, vector<1x4x4xbf16>
    %63 = vector.shape_cast %62 : vector<1x4x4xbf16> to vector<4x4xbf16>
    %64 = arith.truncf %61 : vector<4x128xf32> to vector<4x128xbf16>
    %cst_41 = arith.constant dense<0.000000e+00> : vector<4x128xf32>
    %65 = tpu.matmul %63, %64, %cst_41 {dimension_numbers = #tpu.dot_dimension_numbers<[1], [0], [0], [1], [0, 0, 1, 1], [], []>} : vector<4x4xbf16>, vector<4x128xbf16>, vector<4x128xf32> -> vector<4x128xf32>
    %66 = arith.addf %55, %65 : vector<4x128xf32>
    %c257_i32 = arith.constant 257 : i32
    %67 = tpu.dynamic_rotate %33 by %c257_i32 dim 1 : vector<4x384xf32>, i32 -> vector<4x384xf32>
    %68 = vector.extract_strided_slice %67 {offsets = [0, 0], sizes = [4, 128], strides = [1, 1]} : vector<4x384xf32> to vector<4x128xf32>
    %cst_42 = arith.constant 0.000000e+00 : f32
    %69 = vector.shape_cast %36 : vector<1x128xi1> to vector<1x128xi1>
    %70 = vector.broadcast %69 : vector<1x128xi1> to vector<4x128xi1>
    %71 = vector.broadcast %cst_42 : f32 to vector<4x128xf32>
    %72 = arith.select %70, %68, %71 : vector<4x128xi1>, vector<4x128xf32>
    %c3 = arith.constant 3 : index
    %c0_43 = arith.constant 0 : index
    %c0_44 = arith.constant 0 : index
    %73 = vector.load %arg8[%c3, %c0_43, %c0_44] : memref<9x4x4xbf16, #tpu.memory_space<vmem>>, vector<1x4x4xbf16>
    %74 = vector.shape_cast %73 : vector<1x4x4xbf16> to vector<4x4xbf16>
    %75 = arith.truncf %72 : vector<4x128xf32> to vector<4x128xbf16>
    %cst_45 = arith.constant dense<0.000000e+00> : vector<4x128xf32>
    %76 = tpu.matmul %74, %75, %cst_45 {dimension_numbers = #tpu.dot_dimension_numbers<[1], [0], [0], [1], [0, 0, 1, 1], [], []>} : vector<4x4xbf16>, vector<4x128xbf16>, vector<4x128xf32> -> vector<4x128xf32>
    %77 = arith.addf %66, %76 : vector<4x128xf32>
    %c4 = arith.constant 4 : index
    %c0_46 = arith.constant 0 : index
    %c0_47 = arith.constant 0 : index
    %78 = vector.load %arg8[%c4, %c0_46, %c0_47] : memref<9x4x4xbf16, #tpu.memory_space<vmem>>, vector<1x4x4xbf16>
    %79 = vector.shape_cast %78 : vector<1x4x4xbf16> to vector<4x4xbf16>
    %80 = arith.truncf %8 : vector<4x128xf32> to vector<4x128xbf16>
    %cst_48 = arith.constant dense<0.000000e+00> : vector<4x128xf32>
    %81 = tpu.matmul %79, %80, %cst_48 {dimension_numbers = #tpu.dot_dimension_numbers<[1], [0], [0], [1], [0, 0, 1, 1], [], []>} : vector<4x4xbf16>, vector<4x128xbf16>, vector<4x128xf32> -> vector<4x128xf32>
    %82 = arith.addf %77, %81 : vector<4x128xf32>
    %c255_i32 = arith.constant 255 : i32
    %83 = tpu.dynamic_rotate %33 by %c255_i32 dim 1 : vector<4x384xf32>, i32 -> vector<4x384xf32>
    %84 = vector.extract_strided_slice %83 {offsets = [0, 0], sizes = [4, 128], strides = [1, 1]} : vector<4x384xf32> to vector<4x128xf32>
    %cst_49 = arith.constant 0.000000e+00 : f32
    %85 = vector.shape_cast %38 : vector<1x128xi1> to vector<1x128xi1>
    %86 = vector.broadcast %85 : vector<1x128xi1> to vector<4x128xi1>
    %87 = vector.broadcast %cst_49 : f32 to vector<4x128xf32>
    %88 = arith.select %86, %84, %87 : vector<4x128xi1>, vector<4x128xf32>
    %c5 = arith.constant 5 : index
    %c0_50 = arith.constant 0 : index
    %c0_51 = arith.constant 0 : index
    %89 = vector.load %arg8[%c5, %c0_50, %c0_51] : memref<9x4x4xbf16, #tpu.memory_space<vmem>>, vector<1x4x4xbf16>
    %90 = vector.shape_cast %89 : vector<1x4x4xbf16> to vector<4x4xbf16>
    %91 = arith.truncf %88 : vector<4x128xf32> to vector<4x128xbf16>
    %cst_52 = arith.constant dense<0.000000e+00> : vector<4x128xf32>
    %92 = tpu.matmul %90, %91, %cst_52 {dimension_numbers = #tpu.dot_dimension_numbers<[1], [0], [0], [1], [0, 0, 1, 1], [], []>} : vector<4x4xbf16>, vector<4x128xbf16>, vector<4x128xf32> -> vector<4x128xf32>
    %93 = arith.addf %82, %92 : vector<4x128xf32>
    %c241_i32 = arith.constant 241 : i32
    %94 = tpu.dynamic_rotate %33 by %c241_i32 dim 1 : vector<4x384xf32>, i32 -> vector<4x384xf32>
    %95 = vector.extract_strided_slice %94 {offsets = [0, 0], sizes = [4, 128], strides = [1, 1]} : vector<4x384xf32> to vector<4x128xf32>
    %cst_53 = arith.constant 0.000000e+00 : f32
    %96 = vector.shape_cast %36 : vector<1x128xi1> to vector<1x128xi1>
    %97 = vector.broadcast %96 : vector<1x128xi1> to vector<4x128xi1>
    %98 = vector.broadcast %cst_53 : f32 to vector<4x128xf32>
    %99 = arith.select %97, %95, %98 : vector<4x128xi1>, vector<4x128xf32>
    %c6 = arith.constant 6 : index
    %c0_54 = arith.constant 0 : index
    %c0_55 = arith.constant 0 : index
    %100 = vector.load %arg8[%c6, %c0_54, %c0_55] : memref<9x4x4xbf16, #tpu.memory_space<vmem>>, vector<1x4x4xbf16>
    %101 = vector.shape_cast %100 : vector<1x4x4xbf16> to vector<4x4xbf16>
    %102 = arith.truncf %99 : vector<4x128xf32> to vector<4x128xbf16>
    %cst_56 = arith.constant dense<0.000000e+00> : vector<4x128xf32>
    %103 = tpu.matmul %101, %102, %cst_56 {dimension_numbers = #tpu.dot_dimension_numbers<[1], [0], [0], [1], [0, 0, 1, 1], [], []>} : vector<4x4xbf16>, vector<4x128xbf16>, vector<4x128xf32> -> vector<4x128xf32>
    %104 = arith.addf %93, %103 : vector<4x128xf32>
    %c240_i32 = arith.constant 240 : i32
    %105 = tpu.dynamic_rotate %33 by %c240_i32 dim 1 : vector<4x384xf32>, i32 -> vector<4x384xf32>
    %106 = vector.extract_strided_slice %105 {offsets = [0, 0], sizes = [4, 128], strides = [1, 1]} : vector<4x384xf32> to vector<4x128xf32>
    %c7 = arith.constant 7 : index
    %c0_57 = arith.constant 0 : index
    %c0_58 = arith.constant 0 : index
    %107 = vector.load %arg8[%c7, %c0_57, %c0_58] : memref<9x4x4xbf16, #tpu.memory_space<vmem>>, vector<1x4x4xbf16>
    %108 = vector.shape_cast %107 : vector<1x4x4xbf16> to vector<4x4xbf16>
    %109 = arith.truncf %106 : vector<4x128xf32> to vector<4x128xbf16>
    %cst_59 = arith.constant dense<0.000000e+00> : vector<4x128xf32>
    %110 = tpu.matmul %108, %109, %cst_59 {dimension_numbers = #tpu.dot_dimension_numbers<[1], [0], [0], [1], [0, 0, 1, 1], [], []>} : vector<4x4xbf16>, vector<4x128xbf16>, vector<4x128xf32> -> vector<4x128xf32>
    %111 = arith.addf %104, %110 : vector<4x128xf32>
    %c239_i32 = arith.constant 239 : i32
    %112 = tpu.dynamic_rotate %33 by %c239_i32 dim 1 : vector<4x384xf32>, i32 -> vector<4x384xf32>
    %113 = vector.extract_strided_slice %112 {offsets = [0, 0], sizes = [4, 128], strides = [1, 1]} : vector<4x384xf32> to vector<4x128xf32>
    %cst_60 = arith.constant 0.000000e+00 : f32
    %114 = vector.shape_cast %38 : vector<1x128xi1> to vector<1x128xi1>
    %115 = vector.broadcast %114 : vector<1x128xi1> to vector<4x128xi1>
    %116 = vector.broadcast %cst_60 : f32 to vector<4x128xf32>
    %117 = arith.select %115, %113, %116 : vector<4x128xi1>, vector<4x128xf32>
    %c8 = arith.constant 8 : index
    %c0_61 = arith.constant 0 : index
    %c0_62 = arith.constant 0 : index
    %118 = vector.load %arg8[%c8, %c0_61, %c0_62] : memref<9x4x4xbf16, #tpu.memory_space<vmem>>, vector<1x4x4xbf16>
    %119 = vector.shape_cast %118 : vector<1x4x4xbf16> to vector<4x4xbf16>
    %120 = arith.truncf %117 : vector<4x128xf32> to vector<4x128xbf16>
    %cst_63 = arith.constant dense<0.000000e+00> : vector<4x128xf32>
    %121 = tpu.matmul %119, %120, %cst_63 {dimension_numbers = #tpu.dot_dimension_numbers<[1], [0], [0], [1], [0, 0, 1, 1], [], []>} : vector<4x4xbf16>, vector<4x128xbf16>, vector<4x128xf32> -> vector<4x128xf32>
    %122 = arith.addf %111, %121 : vector<4x128xf32>
    %c0_64 = arith.constant 0 : index
    %c0_65 = arith.constant 0 : index
    %123 = vector.load %arg9[%c0_64, %c0_65] : memref<4x1xf32, #tpu.memory_space<vmem>>, vector<4x1xf32>
    %124 = vector.broadcast %123 : vector<4x1xf32> to vector<4x128xf32>
    %125 = arith.addf %122, %124 : vector<4x128xf32>
    %cst_66 = arith.constant 0.000000e+00 : f32
    %126 = vector.broadcast %cst_66 : f32 to vector<4x128xf32>
    %127 = arith.maximumf %125, %126 : vector<4x128xf32>
    %c0_67 = arith.constant 0 : index
    %c0_68 = arith.constant 0 : index
    %128 = vector.load %arg10[%c0_67, %c0_68] : memref<16x4xbf16, #tpu.memory_space<vmem>>, vector<16x4xbf16>
    %129 = arith.truncf %127 : vector<4x128xf32> to vector<4x128xbf16>
    %cst_69 = arith.constant dense<0.000000e+00> : vector<16x128xf32>
    %130 = tpu.matmul %128, %129, %cst_69 {dimension_numbers = #tpu.dot_dimension_numbers<[1], [0], [0], [1], [0, 0, 1, 1], [], []>} : vector<16x4xbf16>, vector<4x128xbf16>, vector<16x128xf32> -> vector<16x128xf32>
    %c0_70 = arith.constant 0 : index
    %c0_71 = arith.constant 0 : index
    %131 = vector.load %arg11[%c0_70, %c0_71] : memref<16x1xf32, #tpu.memory_space<vmem>>, vector<16x1xf32>
    %132 = vector.broadcast %131 : vector<16x1xf32> to vector<16x128xf32>
    %133 = arith.addf %130, %132 : vector<16x128xf32>
    %134 = arith.extf %1 : vector<16x128xbf16> to vector<16x128xf32>
    %135 = arith.addf %133, %134 : vector<16x128xf32>
    %cst_72 = arith.constant 0.000000e+00 : f32
    %136 = vector.broadcast %cst_72 : f32 to vector<16x128xf32>
    %137 = arith.maximumf %135, %136 : vector<16x128xf32>
    %138 = arith.truncf %137 : vector<16x128xf32> to vector<16x128xbf16>
    %c0_73 = arith.constant 0 : index
    %c0_74 = arith.constant 0 : index
    %c0_75 = arith.constant 0 : index
    %139 = vector.load %arg12[%c0_73, %c0_74, %c0_75] : memref<1x16x128xbf16, #tpu.memory_space<vmem>>, vector<1x16x128xbf16>
    %140 = vector.shape_cast %139 : vector<1x16x128xbf16> to vector<16x128xbf16>
    %141 = vector.shape_cast %138 : vector<16x128xbf16> to vector<1x16x128xbf16>
    tpu.vector_store %arg12[%c0_73, %c0_74, %c0_75], %141 {strides = array<i32>} : memref<1x16x128xbf16, #tpu.memory_space<vmem>>, vector<1x16x128xbf16>,
    return
  }
  func.func @transform_0(%arg0: i32, %arg1: i32) -> (i32, i32) {
    %c0_i32 = arith.constant 0 : i32
    %c0_i32_0 = arith.constant 0 : i32
    %c0_i32_1 = arith.constant 0 : i32
    return %c0_i32, %c0_i32_0 : i32, i32
  }
  func.func @transform_1(%arg0: i32, %arg1: i32) -> (i32, i32, i32) {
    %c0_i32 = arith.constant 0 : i32
    %c0_i32_0 = arith.constant 0 : i32
    return %arg0, %c0_i32, %arg1 : i32, i32, i32
  }
  func.func @transform_2(%arg0: i32, %arg1: i32) -> (i32, i32, i32) {
    %c1_i32 = arith.constant 1 : i32
    %0 = arith.muli %arg1, %c1_i32 : i32
    %c1_i32_0 = arith.constant 1 : i32
    %1 = arith.subi %0, %c1_i32_0 : i32
    %c0_i32 = arith.constant 0 : i32
    %2 = arith.maxsi %1, %c0_i32 : i32
    %c0_i32_1 = arith.constant 0 : i32
    %c0_i32_2 = arith.constant 0 : i32
    return %arg0, %c0_i32_1, %2 : i32, i32, i32
  }
  func.func @transform_3(%arg0: i32, %arg1: i32) -> (i32, i32, i32) {
    %c1_i32 = arith.constant 1 : i32
    %0 = arith.addi %arg1, %c1_i32 : i32
    %c1_i32_0 = arith.constant 1 : i32
    %1 = arith.muli %0, %c1_i32_0 : i32
    %c1_i32_1 = arith.constant 1 : i32
    %2 = arith.minsi %1, %c1_i32_1 : i32
    %c0_i32 = arith.constant 0 : i32
    %c0_i32_2 = arith.constant 0 : i32
    return %arg0, %c0_i32, %2 : i32, i32, i32
  }
  func.func @transform_4(%arg0: i32, %arg1: i32) -> (i32, i32) {
    %c0_i32 = arith.constant 0 : i32
    %c0_i32_0 = arith.constant 0 : i32
    %c0_i32_1 = arith.constant 0 : i32
    return %c0_i32, %c0_i32_0 : i32, i32
  }
  func.func @transform_5(%arg0: i32, %arg1: i32) -> (i32, i32) {
    %c0_i32 = arith.constant 0 : i32
    %c0_i32_0 = arith.constant 0 : i32
    %c0_i32_1 = arith.constant 0 : i32
    return %c0_i32, %c0_i32_0 : i32, i32
  }
  func.func @transform_6(%arg0: i32, %arg1: i32) -> (i32, i32, i32) {
    %c0_i32 = arith.constant 0 : i32
    %c0_i32_0 = arith.constant 0 : i32
    %c0_i32_1 = arith.constant 0 : i32
    %c0_i32_2 = arith.constant 0 : i32
    return %c0_i32, %c0_i32_0, %c0_i32_1 : i32, i32, i32
  }
  func.func @transform_7(%arg0: i32, %arg1: i32) -> (i32, i32) {
    %c0_i32 = arith.constant 0 : i32
    %c0_i32_0 = arith.constant 0 : i32
    %c0_i32_1 = arith.constant 0 : i32
    return %c0_i32, %c0_i32_0 : i32, i32
  }
  func.func @transform_8(%arg0: i32, %arg1: i32) -> (i32, i32) {
    %c0_i32 = arith.constant 0 : i32
    %c0_i32_0 = arith.constant 0 : i32
    %c0_i32_1 = arith.constant 0 : i32
    return %c0_i32, %c0_i32_0 : i32, i32
  }
  func.func @transform_9(%arg0: i32, %arg1: i32) -> (i32, i32) {
    %c0_i32 = arith.constant 0 : i32
    %c0_i32_0 = arith.constant 0 : i32
    %c0_i32_1 = arith.constant 0 : i32
    return %c0_i32, %c0_i32_0 : i32, i32
  }
  func.func @transform_10(%arg0: i32, %arg1: i32) -> (i32, i32, i32) {
    %c0_i32 = arith.constant 0 : i32
    %c0_i32_0 = arith.constant 0 : i32
    return %arg0, %c0_i32, %arg1 : i32, i32, i32
  }
}

</mosaic_0001>

<llo_original>
// kernel: tpu_custom_call.1
$region0: #{tpu_custom_call.1}
  #allocation0 [shape = 'u32[]', space=smem, size = 0x4, offset = 0x4, fixed_abs, tag = 'smem constant byte address 0x4 - core index']
  #allocation1 [shape = 'u32[144,128]{1,0:T(1,128)}', space=vmem, size = 0x12000, scoped, tag = 'internal scratch']
  %s0 = inlined_call_operand.hbm [shape: s32[1,128], index: 0, kind: input, shape index: {}]
  %s1 = inlined_call_operand.vmem [shape: bf16[2,16,256], index: 1, kind: input, shape index: {}]
  %s2 = inlined_call_operand.vmem [shape: bf16[2,16,256], index: 2, kind: input, shape index: {}]
  %s3 = inlined_call_operand.hbm [shape: bf16[2,16,256], index: 3, kind: input, shape index: {}]
  %s4 = inlined_call_operand.vmem [shape: bf16[4,16], index: 4, kind: input, shape index: {}]
  %s5 = inlined_call_operand.vmem [shape: f32[4,1], index: 5, kind: input, shape index: {}]
  %s6 = inlined_call_operand.vmem [shape: bf16[9,4,4], index: 6, kind: input, shape index: {}]
  %s7 = inlined_call_operand.vmem [shape: f32[4,1], index: 7, kind: input, shape index: {}]
  %s8 = inlined_call_operand.vmem [shape: bf16[16,4], index: 8, kind: input, shape index: {}]
  %s9 = inlined_call_operand.vmem [shape: f32[16,1], index: 9, kind: input, shape index: {}]
  %s10 = inlined_call_operand.hbm [shape: bf16[2,16,256], index: 10, kind: output, shape index: {}]
  %s11 = sld [smem:[#allocation0]]
  $region163: #{tpu_custom_call.1} parent=0
    _
  %s13 = ssub.s32 1, %s11
  %s14 = scalar_select 0, %s13, %s11
  $region1: #{tpu_custom_call.1} parent=0
    #allocation2 [shape = 'u8[512]{0}', space=vmem, size = 0x400, scoped, tag = 'input window, operand 0, single buffered']
    #allocation3 [shape = 's32[2]{0}', space=sflag, size = 0x8, scoped, tag = 'scoped memory for tpu_custom_call.1']
    #allocation4 [shape = 's32[2]{0}', space=sflag, size = 0x8, scoped, tag = 'scoped memory for tpu_custom_call.1']
    #allocation5 [shape = 'u8[8192]{0}', space=vmem, size = 0x2000, scoped, tag = 'input window, operand 1']
    #allocation6 [shape = 'u8[8192]{0}', space=vmem, size = 0x2000, scoped, tag = 'input window, operand 2']
    #allocation7 [shape = 'u8[8192]{0}', space=vmem, size = 0x2000, scoped, tag = 'input window, operand 3']
    #allocation8 [shape = 's32[2]{0}', space=sflag, size = 0x8, scoped, tag = 'scoped memory for tpu_custom_call.1']
    #allocation9 [shape = 'u8[8192]{0}', space=vmem, size = 0x2000, scoped, tag = 'output window, operand 0']
    %15 = vsyncpa [#allocation3], 0
    %16 = vsyncpa [#allocation8], 0
    %s17 = scalar_lea.sflag [#allocation8], 1
    %18 = vsyncpa %s17, 0
    %19 = vsyncpa [#allocation4], 0
    %s20 = scalar_lea.sflag [#allocation4], 1
    %21 = vsyncpa %s20, 0
    loop: start=0, step=1, limit=6
    $region2: #{tpu_custom_call.1} parent=1 // loop_pre_header
      _
    $region3: #{tpu_custom_call.1} parent=1 // loop_header
      %s23 = sphi 0, %s27
      %p24 = scmp.ge.s32.totalorder %s23, 6
      %s30 = sphi 0, %s42
      %s31 = sphi 0, %s38
      %s32 = sphi 0, %s30
      %s33 = sphi 0, %s31
      %s34 = sphi 0, %s32
      %s35 = sphi 0, %s33
      %s43 = sphi 0, %s43
      %s45 = sphi 0, %s43
      %s46 = sphi 0, %s45
      %s60 = sphi 0, %s46
      %s68 = sphi 0, %s70
      %s71 = sphi 0, %s68
      %s72 = sphi 0, %s71
      %s88 = sphi 0, %s72
      %s102 = sphi 0, %s104
      %s105 = sphi 0, %s102
      %s106 = sphi 0, %s105
      %s122 = sphi 0, %s106
      %s136 = sphi 0, %s138
      %s139 = sphi 0, %s136
      %s140 = sphi 0, %s139
      %s156 = sphi 0, %s140
      %s160 = sphi 0, %s160
      %s162 = sphi 0, %s160
      %s163 = sphi 0, %s162
      %s177 = sphi 0, %s163
      %s181 = sphi 0, %s181
      %s183 = sphi 0, %s181
      %s184 = sphi 0, %s183
      %s198 = sphi 0, %s184
      %s202 = sphi 0, %s202
      %s204 = sphi 0, %s202
      %s205 = sphi 0, %s204
      %s219 = sphi 0, %s205
      %s223 = sphi 0, %s223
      %s225 = sphi 0, %s223
      %s226 = sphi 0, %s225
      %s240 = sphi 0, %s226
      %s244 = sphi 0, %s244
      %s246 = sphi 0, %s244
      %s247 = sphi 0, %s246
      %s261 = sphi 0, %s247
      %s265 = sphi 0, %s265
      %s267 = sphi 0, %s265
      %s268 = sphi 0, %s267
      %s282 = sphi 0, %s268
      %s290 = sphi 0, %s292
      %s293 = sphi 0, %s290
      %s294 = sphi 0, %s293
      %s310 = sphi 0, %s294
    $region4: #{tpu_custom_call.1} parent=1 // loop_header_branch
      %26 = sbr.rel (%p24) target = $region8
    $region5: #{tpu_custom_call.1} parent=1 // loop_body
      %s28 = ssub.s32 %s23, 1
      %s29 = ssub.s32 %s23, 2
      %s36 = sadd.s32 1, %s31
      %p37 = scmp.ge.s32.totalorder %s36, 2
      %s38 = scalar_select %p37, 0, %s36
      %s39 = sadd.s32 1, %s30
      %s40 = scalar_select %p37, %s39, %s30
      %p41 = scmp.ge.s32.totalorder %s40, 2
      %s42 = scalar_select %p41, 0, %s40
      %s44 = sadd.s32 %s43, 1
      %p47 = scmp.eq.s32.totalorder %s23, 3
      %p48 = scmp.ne.s32.totalorder %s43, %s45
      %p49 = scmp.eq.s32.totalorder %s23, 0
      %p50 = por %p48, %p49
      %p51 = scmp.ne.s32.totalorder %s43, %s45
      %p52 = scmp.eq.s32.totalorder %s28, 3
      %p53 = por %p51, %p52
      %p54 = scmp.ne.s32.totalorder %s45, %s46
      %p55 = scmp.eq.s32.totalorder %s28, 0
      %p56 = por %p54, %p55
      %p57 = scmp.ne.s32.totalorder %s45, %s46
      %p58 = scmp.eq.s32.totalorder %s29, 3
      %p59 = por %p57, %p58
      %p61 = scmp.ne.s32.totalorder %s46, %s60
      %p62 = scmp.eq.s32.totalorder %s29, 0
      %p63 = por %p61, %p62
      %s64 = ssub.s32 %s30, %s42
      %s65 = ssub.s32 %s31, %s38
      %s66 = sor.u32 %s64, %s65
      %p67 = scmp.eq.s32.totalorder %s66, 0
      %s69 = sadd.s32 %s68, 1
      %s70 = scalar_select %p67, %s68, %s69
      %p73 = pneg %p67
      %p74 = scmp.eq.s32.totalorder %s23, 3
      %p75 = por %p73, %p74
      %p76 = scmp.ne.s32.totalorder %s68, %s71
      %p77 = scmp.eq.s32.totalorder %s23, 0
      %p78 = por %p76, %p77
      %p79 = scmp.ne.s32.totalorder %s68, %s71
      %p80 = scmp.eq.s32.totalorder %s28, 3
      %p81 = por %p79, %p80
      %p82 = scmp.ne.s32.totalorder %s71, %s72
      %p83 = scmp.eq.s32.totalorder %s28, 0
      %p84 = por %p82, %p83
      %p85 = scmp.ne.s32.totalorder %s71, %s72
      %p86 = scmp.eq.s32.totalorder %s29, 3
      %p87 = por %p85, %p86
      %p89 = scmp.ne.s32.totalorder %s72, %s88
      %p90 = scmp.eq.s32.totalorder %s29, 0
      %p91 = por %p89, %p90
      %s92 = ssub.s32 %s31, 1
      %p93 = scmp.gt.s32.totalorder %s92, 0
      %s94 = scalar_select %p93, %s92, 0
      %s95 = ssub.s32 %s38, 1
      %p96 = scmp.gt.s32.totalorder %s95, 0
      %s97 = scalar_select %p96, %s95, 0
      %s98 = ssub.s32 %s30, %s42
      %s99 = ssub.s32 %s94, %s97
      %s100 = sor.u32 %s98, %s99
      %p101 = scmp.eq.s32.totalorder %s100, 0
      %s103 = sadd.s32 %s102, 1
      %s104 = scalar_select %p101, %s102, %s103
      %p107 = pneg %p101
      %p108 = scmp.eq.s32.totalorder %s23, 3
      %p109 = por %p107, %p108
      %p110 = scmp.ne.s32.totalorder %s102, %s105
      %p111 = scmp.eq.s32.totalorder %s23, 0
      %p112 = por %p110, %p111
      %p113 = scmp.ne.s32.totalorder %s102, %s105
      %p114 = scmp.eq.s32.totalorder %s28, 3
      %p115 = por %p113, %p114
      %p116 = scmp.ne.s32.totalorder %s105, %s106
      %p117 = scmp.eq.s32.totalorder %s28, 0
      %p118 = por %p116, %p117
      %p119 = scmp.ne.s32.totalorder %s105, %s106
      %p120 = scmp.eq.s32.totalorder %s29, 3
      %p121 = por %p119, %p120
      %p123 = scmp.ne.s32.totalorder %s106, %s122
      %p124 = scmp.eq.s32.totalorder %s29, 0
      %p125 = por %p123, %p124
      %s126 = sadd.s32 %s31, 1
      %p127 = scmp.lt.s32.totalorder %s126, 1
      %s128 = scalar_select %p127, %s126, 1
      %s129 = sadd.s32 %s38, 1
      %p130 = scmp.lt.s32.totalorder %s129, 1
      %s131 = scalar_select %p130, %s129, 1
      %s132 = ssub.s32 %s30, %s42
      %s133 = ssub.s32 %s128, %s131
      %s134 = sor.u32 %s132, %s133
      %p135 = scmp.eq.s32.totalorder %s134, 0
      %s137 = sadd.s32 %s136, 1
      %s138 = scalar_select %p135, %s136, %s137
      %p141 = pneg %p135
      %p142 = scmp.eq.s32.totalorder %s23, 3
      %p143 = por %p141, %p142
      %p144 = scmp.ne.s32.totalorder %s136, %s139
      %p145 = scmp.eq.s32.totalorder %s23, 0
      %p146 = por %p144, %p145
      %p147 = scmp.ne.s32.totalorder %s136, %s139
      %p148 = scmp.eq.s32.totalorder %s28, 3
      %p149 = por %p147, %p148
      %p150 = scmp.ne.s32.totalorder %s139, %s140
      %p151 = scmp.eq.s32.totalorder %s28, 0
      %p152 = por %p150, %p151
      %p153 = scmp.ne.s32.totalorder %s139, %s140
      %p154 = scmp.eq.s32.totalorder %s29, 3
      %p155 = por %p153, %p154
      %p157 = scmp.ne.s32.totalorder %s140, %s156
      %p158 = scmp.eq.s32.totalorder %s29, 0
      %p159 = por %p157, %p158
      %s161 = sadd.s32 %s160, 1
      %p164 = scmp.eq.s32.totalorder %s23, 3
      %p165 = scmp.ne.s32.totalorder %s160, %s162
      %p166 = scmp.eq.s32.totalorder %s23, 0
      %p167 = por %p165, %p166
      %p168 = scmp.ne.s32.totalorder %s160, %s162
      %p169 = scmp.eq.s32.totalorder %s28, 3
      %p170 = por %p168, %p169
      %p171 = scmp.ne.s32.totalorder %s162, %s163
      %p172 = scmp.eq.s32.totalorder %s28, 0
      %p173 = por %p171, %p172
      %p174 = scmp.ne.s32.totalorder %s162, %s163
      %p175 = scmp.eq.s32.totalorder %s29, 3
      %p176 = por %p174, %p175
      %p178 = scmp.ne.s32.totalorder %s163, %s177
      %p179 = scmp.eq.s32.totalorder %s29, 0
      %p180 = por %p178, %p179
      %s182 = sadd.s32 %s181, 1
      %p185 = scmp.eq.s32.totalorder %s23, 3
      %p186 = scmp.ne.s32.totalorder %s181, %s183
      %p187 = scmp.eq.s32.totalorder %s23, 0
      %p188 = por %p186, %p187
      %p189 = scmp.ne.s32.totalorder %s181, %s183
      %p190 = scmp.eq.s32.totalorder %s28, 3
      %p191 = por %p189, %p190
      %p192 = scmp.ne.s32.totalorder %s183, %s184
      %p193 = scmp.eq.s32.totalorder %s28, 0
      %p194 = por %p192, %p193
      %p195 = scmp.ne.s32.totalorder %s183, %s184
      %p196 = scmp.eq.s32.totalorder %s29, 3
      %p197 = por %p195, %p196
      %p199 = scmp.ne.s32.totalorder %s184, %s198
      %p200 = scmp.eq.s32.totalorder %s29, 0
      %p201 = por %p199, %p200
      %s203 = sadd.s32 %s202, 1
      %p206 = scmp.eq.s32.totalorder %s23, 3
      %p207 = scmp.ne.s32.totalorder %s202, %s204
      %p208 = scmp.eq.s32.totalorder %s23, 0
      %p209 = por %p207, %p208
      %p210 = scmp.ne.s32.totalorder %s202, %s204
      %p211 = scmp.eq.s32.totalorder %s28, 3
      %p212 = por %p210, %p211
      %p213 = scmp.ne.s32.totalorder %s204, %s205
      %p214 = scmp.eq.s32.totalorder %s28, 0
      %p215 = por %p213, %p214
      %p216 = scmp.ne.s32.totalorder %s204, %s205
      %p217 = scmp.eq.s32.totalorder %s29, 3
      %p218 = por %p216, %p217
      %p220 = scmp.ne.s32.totalorder %s205, %s219
      %p221 = scmp.eq.s32.totalorder %s29, 0
      %p222 = por %p220, %p221
      %s224 = sadd.s32 %s223, 1
      %p227 = scmp.eq.s32.totalorder %s23, 3
      %p228 = scmp.ne.s32.totalorder %s223, %s225
      %p229 = scmp.eq.s32.totalorder %s23, 0
      %p230 = por %p228, %p229
      %p231 = scmp.ne.s32.totalorder %s223, %s225
      %p232 = scmp.eq.s32.totalorder %s28, 3
      %p233 = por %p231, %p232
      %p234 = scmp.ne.s32.totalorder %s225, %s226
      %p235 = scmp.eq.s32.totalorder %s28, 0
      %p236 = por %p234, %p235
      %p237 = scmp.ne.s32.totalorder %s225, %s226
      %p238 = scmp.eq.s32.totalorder %s29, 3
      %p239 = por %p237, %p238
      %p241 = scmp.ne.s32.totalorder %s226, %s240
      %p242 = scmp.eq.s32.totalorder %s29, 0
      %p243 = por %p241, %p242
      %s245 = sadd.s32 %s244, 1
      %p248 = scmp.eq.s32.totalorder %s23, 3
      %p249 = scmp.ne.s32.totalorder %s244, %s246
      %p250 = scmp.eq.s32.totalorder %s23, 0
      %p251 = por %p249, %p250
      %p252 = scmp.ne.s32.totalorder %s244, %s246
      %p253 = scmp.eq.s32.totalorder %s28, 3
      %p254 = por %p252, %p253
      %p255 = scmp.ne.s32.totalorder %s246, %s247
      %p256 = scmp.eq.s32.totalorder %s28, 0
      %p257 = por %p255, %p256
      %p258 = scmp.ne.s32.totalorder %s246, %s247
      %p259 = scmp.eq.s32.totalorder %s29, 3
      %p260 = por %p258, %p259
      %p262 = scmp.ne.s32.totalorder %s247, %s261
      %p263 = scmp.eq.s32.totalorder %s29, 0
      %p264 = por %p262, %p263
      %s266 = sadd.s32 %s265, 1
      %p269 = scmp.eq.s32.totalorder %s23, 3
      %p270 = scmp.ne.s32.totalorder %s265, %s267
      %p271 = scmp.eq.s32.totalorder %s23, 0
      %p272 = por %p270, %p271
      %p273 = scmp.ne.s32.totalorder %s265, %s267
      %p274 = scmp.eq.s32.totalorder %s28, 3
      %p275 = por %p273, %p274
      %p276 = scmp.ne.s32.totalorder %s267, %s268
      %p277 = scmp.eq.s32.totalorder %s28, 0
      %p278 = por %p276, %p277
      %p279 = scmp.ne.s32.totalorder %s267, %s268
      %p280 = scmp.eq.s32.totalorder %s29, 3
      %p281 = por %p279, %p280
      %p283 = scmp.ne.s32.totalorder %s268, %s282
      %p284 = scmp.eq.s32.totalorder %s29, 0
      %p285 = por %p283, %p284
      %s286 = ssub.s32 %s30, %s42
      %s287 = ssub.s32 %s31, %s38
      %s288 = sor.u32 %s286, %s287
      %p289 = scmp.eq.s32.totalorder %s288, 0
      %s291 = sadd.s32 %s290, 1
      %s292 = scalar_select %p289, %s290, %s291
      %p295 = pneg %p289
      %p296 = scmp.eq.s32.totalorder %s23, 3
      %p297 = por %p295, %p296
      %p298 = scmp.ne.s32.totalorder %s290, %s293
      %p299 = scmp.eq.s32.totalorder %s23, 0
      %p300 = por %p298, %p299
      %p301 = scmp.ne.s32.totalorder %s290, %s293
      %p302 = scmp.eq.s32.totalorder %s28, 3
      %p303 = por %p301, %p302
      %p304 = scmp.ne.s32.totalorder %s293, %s294
      %p305 = scmp.eq.s32.totalorder %s28, 0
      %p306 = por %p304, %p305
      %p307 = scmp.ne.s32.totalorder %s293, %s294
      %p308 = scmp.eq.s32.totalorder %s29, 3
      %p309 = por %p307, %p308
      %p311 = scmp.ne.s32.totalorder %s294, %s310
      %p312 = scmp.eq.s32.totalorder %s29, 0
      %p313 = por %p311, %p312
      %p314 = scmp.le.s32.totalorder 1, %s23
      %p315 = scmp.lt.s32.totalorder %s23, 5
      %p316 = pnand %p314, %p315
      %p317 = pneg %p316
      // Predicated region
      $region9: #{tpu_custom_call.1} parent=5 // pred_check
        _
      $region10: #{tpu_custom_call.1} parent=5 // pred_check_branch
        %319 = sbr.rel (%p316) target = $region12
      $region11: #{tpu_custom_call.1} parent=5 // pred_region
        %s320 = ssub.s32 %s23, 1
        // Predicated region
        $region13: #{tpu_custom_call.1} parent=11 // pred_check
          %p321 = pneg %p56
        $region14: #{tpu_custom_call.1} parent=11 // pred_check_branch
          %323 = sbr.rel (%p321) target = $region16
        $region15: #{tpu_custom_call.1} parent=11 // pred_region
          %s325 = ssub.s32 16, 16
          %326 = vsyncadd [#allocation3], %s325
          %s328 = sshll.u32 [#allocation2], 4
          %s329 = int_to_ptr.vmem [resolvable:$true] %s328
          %331 = dma.hbm_to_vmem [thread:$0]  %s0, 16, %s329, [#allocation3]
        $region16: #{tpu_custom_call.1} parent=11 // pred_fallthru
          _
        // Predicated region
        $region17: #{tpu_custom_call.1} parent=11 // pred_check
          %p332 = pneg %p173
        $region18: #{tpu_custom_call.1} parent=11 // pred_check_branch
          %334 = sbr.rel (%p332) target = $region20
        $region19: #{tpu_custom_call.1} parent=11 // pred_region
          _
        $region20: #{tpu_custom_call.1} parent=11 // pred_fallthru
          _
        // Predicated region
        $region21: #{tpu_custom_call.1} parent=11 // pred_check
          %p335 = pneg %p194
        $region22: #{tpu_custom_call.1} parent=11 // pred_check_branch
          %337 = sbr.rel (%p335) target = $region24
        $region23: #{tpu_custom_call.1} parent=11 // pred_region
          _
        $region24: #{tpu_custom_call.1} parent=11 // pred_fallthru
          _
        // Predicated region
        $region25: #{tpu_custom_call.1} parent=11 // pred_check
          %p338 = pneg %p215
        $region26: #{tpu_custom_call.1} parent=11 // pred_check_branch
          %340 = sbr.rel (%p338) target = $region28
        $region27: #{tpu_custom_call.1} parent=11 // pred_region
          _
        $region28: #{tpu_custom_call.1} parent=11 // pred_fallthru
          _
        // Predicated region
        $region29: #{tpu_custom_call.1} parent=11 // pred_check
          %p341 = pneg %p236
        $region30: #{tpu_custom_call.1} parent=11 // pred_check_branch
          %343 = sbr.rel (%p341) target = $region32
        $region31: #{tpu_custom_call.1} parent=11 // pred_region
          _
        $region32: #{tpu_custom_call.1} parent=11 // pred_fallthru
          _
        // Predicated region
        $region33: #{tpu_custom_call.1} parent=11 // pred_check
          %p344 = pneg %p257
        $region34: #{tpu_custom_call.1} parent=11 // pred_check_branch
          %346 = sbr.rel (%p344) target = $region36
        $region35: #{tpu_custom_call.1} parent=11 // pred_region
          _
        $region36: #{tpu_custom_call.1} parent=11 // pred_fallthru
          _
        // Predicated region
        $region37: #{tpu_custom_call.1} parent=11 // pred_check
          %p347 = pneg %p278
        $region38: #{tpu_custom_call.1} parent=11 // pred_check_branch
          %349 = sbr.rel (%p347) target = $region40
        $region39: #{tpu_custom_call.1} parent=11 // pred_region
          _
        $region40: #{tpu_custom_call.1} parent=11 // pred_fallthru
          _
      $region12: #{tpu_custom_call.1} parent=5 // pred_fallthru
        _
      %p350 = scmp.lt.s32.totalorder %s23, 4
      // Predicated region
      $region41: #{tpu_custom_call.1} parent=5 // pred_check
        %p351 = pneg %p350
      $region42: #{tpu_custom_call.1} parent=5 // pred_check_branch
        %353 = sbr.rel (%p351) target = $region44
      $region43: #{tpu_custom_call.1} parent=5 // pred_region
        // Predicated region
        $region45: #{tpu_custom_call.1} parent=43 // pred_check
          %p354 = pneg %p78
        $region46: #{tpu_custom_call.1} parent=43 // pred_check_branch
          %356 = sbr.rel (%p354) target = $region48
        $region47: #{tpu_custom_call.1} parent=43 // pred_region
          %s357 = sand.u32 %s68, 1
          %s358 = sand.u32 %s68, 1
          %s359 = smul.addr %s358, 8
          %s360 = scalar_lea.vmem [#allocation5], %s359
          %s361 = smul.addr %s30, 4
          %s362 = sadd.s32 %s31, %s361
          %s363 = smul.addr %s362, 4
          %s364 = scalar_lea.vmem %s1, %s363
          // Predicated region
          $region49: #{tpu_custom_call.1} parent=47 // pred_check
            _
          $region50: #{tpu_custom_call.1} parent=47 // pred_check_branch
            %366 = sbr.rel (0) target = $region52
          $region51: #{tpu_custom_call.1} parent=47 // pred_region
            // Predicated region
            $region53: #{tpu_custom_call.1} parent=51 // pred_check
              _
            $region54: #{tpu_custom_call.1} parent=51 // pred_check_branch
              %368 = sbr.rel target = $region56
            $region55: #{tpu_custom_call.1} parent=51 // pred_region
              // Predicated region
              $region68: #{tpu_custom_call.1} parent=55 // pred_check
                _
              $region69: #{tpu_custom_call.1} parent=55 // pred_check_branch
                %385 = sbr.rel (0) target = $region71
              $region70: #{tpu_custom_call.1} parent=55 // pred_region
                loop: start=0, step=1, limit=1
                $region72: #{tpu_custom_call.1} parent=70 // loop_pre_header
                  _
                $region73: #{tpu_custom_call.1} parent=70 // loop_header
                  %s387 = sphi 0, %s391
                  %p388 = scmp.ge.s32.totalorder %s387, 1
                  %s392 = sphi %s364, %s364
                  %s393 = sphi %s360, %s360
                $region74: #{tpu_custom_call.1} parent=70 // loop_header_branch
                  %390 = sbr.rel (%p388) target = $region78
                $region75: #{tpu_custom_call.1} parent=70 // loop_body
                  _
                $region76: #{tpu_custom_call.1} parent=70 // loop_footer
                  %s391 = sadd.s32 1, %s387
                $region77: #{tpu_custom_call.1} parent=70 // loop_footer_branch
                  %386 = sbr.rel target = $region73
                $region78: #{tpu_custom_call.1} parent=70 // loop_exit
                  _
                loop: start=0, step=1, limit=1
                $region79: #{tpu_custom_call.1} parent=70 // loop_pre_header
                  _
                $region80: #{tpu_custom_call.1} parent=70 // loop_header
                  %s396 = sphi 0, %s400
                  %p397 = scmp.ge.s32.totalorder %s396, 1
                  %s401 = sphi %s364, %s364
                  %s402 = sphi %s360, %s360
                $region81: #{tpu_custom_call.1} parent=70 // loop_header_branch
                  %399 = sbr.rel (%p397) target = $region85
                $region82: #{tpu_custom_call.1} parent=70 // loop_body
                  %v403 = vld [vmem:[%s401] sm:$0xf]
                  %404 = vst [vmem:[%s402] sm:$0xf] %v403
                  %v405 = vld [vmem:[%s401 + $0x8] sm:$0xf]
                  %406 = vst [vmem:[%s402 + $0x4] sm:$0xf] %v405
                $region83: #{tpu_custom_call.1} parent=70 // loop_footer
                  %s400 = sadd.s32 1, %s396
                $region84: #{tpu_custom_call.1} parent=70 // loop_footer_branch
                  %395 = sbr.rel target = $region80
                $region85: #{tpu_custom_call.1} parent=70 // loop_exit
                  _
              $region71: #{tpu_custom_call.1} parent=55 // pred_fallthru
                _
            $region56: #{tpu_custom_call.1} parent=51 // pred_fallthru
              _
            // Predicated region
            $region57: #{tpu_custom_call.1} parent=51 // pred_check
              _
            $region58: #{tpu_custom_call.1} parent=51 // pred_check_branch
              %370 = sbr.rel (0) target = $region60
            $region59: #{tpu_custom_call.1} parent=51 // pred_region
              loop: start=0, step=1, limit=1
              $region61: #{tpu_custom_call.1} parent=59 // loop_pre_header
                _
              $region62: #{tpu_custom_call.1} parent=59 // loop_header
                %s373 = sphi 0, %s377
                %p374 = scmp.ge.s32.totalorder %s373, 1
                %s378 = sphi %s364, %s364
                %s379 = sphi %s360, %s360
              $region63: #{tpu_custom_call.1} parent=59 // loop_header_branch
                %376 = sbr.rel (%p374) target = $region67
              $region64: #{tpu_custom_call.1} parent=59 // loop_body
                %v380 = vld [vmem:[%s378] sm:$0xf]
                %381 = vst [vmem:[%s379] sm:$0xf] %v380
                %v382 = vld [vmem:[%s378 + $0x8] sm:$0xf]
                %383 = vst [vmem:[%s379 + $0x4] sm:$0xf] %v382
              $region65: #{tpu_custom_call.1} parent=59 // loop_footer
                %s377 = sadd.s32 1, %s373
              $region66: #{tpu_custom_call.1} parent=59 // loop_footer_branch
                %372 = sbr.rel target = $region62
              $region67: #{tpu_custom_call.1} parent=59 // loop_exit
                _
            $region60: #{tpu_custom_call.1} parent=51 // pred_fallthru
              _
          $region52: #{tpu_custom_call.1} parent=47 // pred_fallthru
            _
          %407 = vnop
        $region48: #{tpu_custom_call.1} parent=43 // pred_fallthru
          _
        // Predicated region
        $region86: #{tpu_custom_call.1} parent=43 // pred_check
          %p408 = pneg %p112
        $region87: #{tpu_custom_call.1} parent=43 // pred_check_branch
          %410 = sbr.rel (%p408) target = $region89
        $region88: #{tpu_custom_call.1} parent=43 // pred_region
          %s411 = sand.u32 %s102, 1
          %s412 = sand.u32 %s102, 1
          %s413 = smul.addr %s412, 8
          %s414 = scalar_lea.vmem [#allocation6], %s413
          %s415 = ssub.s32 %s31, 1
          %p416 = scmp.gt.s32.totalorder %s415, 0
          %s417 = scalar_select %p416, %s415, 0
          %s418 = smul.addr %s30, 4
          %s419 = sadd.s32 %s417, %s418
          %s420 = smul.addr %s419, 4
          %s421 = scalar_lea.vmem %s2, %s420
          // Predicated region
          $region90: #{tpu_custom_call.1} parent=88 // pred_check
            _
          $region91: #{tpu_custom_call.1} parent=88 // pred_check_branch
            %423 = sbr.rel (0) target = $region93
          $region92: #{tpu_custom_call.1} parent=88 // pred_region
            // Predicated region
            $region94: #{tpu_custom_call.1} parent=92 // pred_check
              _
            $region95: #{tpu_custom_call.1} parent=92 // pred_check_branch
              %425 = sbr.rel target = $region97
            $region96: #{tpu_custom_call.1} parent=92 // pred_region
              // Predicated region
              $region109: #{tpu_custom_call.1} parent=96 // pred_check
                _
              $region110: #{tpu_custom_call.1} parent=96 // pred_check_branch
                %442 = sbr.rel (0) target = $region112
              $region111: #{tpu_custom_call.1} parent=96 // pred_region
                loop: start=0, step=1, limit=1
                $region113: #{tpu_custom_call.1} parent=111 // loop_pre_header
                  _
                $region114: #{tpu_custom_call.1} parent=111 // loop_header
                  %s444 = sphi 0, %s448
                  %p445 = scmp.ge.s32.totalorder %s444, 1
                  %s449 = sphi %s421, %s421
                  %s450 = sphi %s414, %s414
                $region115: #{tpu_custom_call.1} parent=111 // loop_header_branch
                  %447 = sbr.rel (%p445) target = $region119
                $region116: #{tpu_custom_call.1} parent=111 // loop_body
                  _
                $region117: #{tpu_custom_call.1} parent=111 // loop_footer
                  %s448 = sadd.s32 1, %s444
                $region118: #{tpu_custom_call.1} parent=111 // loop_footer_branch
                  %443 = sbr.rel target = $region114
                $region119: #{tpu_custom_call.1} parent=111 // loop_exit
                  _
                loop: start=0, step=1, limit=1
                $region120: #{tpu_custom_call.1} parent=111 // loop_pre_header
                  _
                $region121: #{tpu_custom_call.1} parent=111 // loop_header
                  %s453 = sphi 0, %s457
                  %p454 = scmp.ge.s32.totalorder %s453, 1
                  %s458 = sphi %s421, %s421
                  %s459 = sphi %s414, %s414
                $region122: #{tpu_custom_call.1} parent=111 // loop_header_branch
                  %456 = sbr.rel (%p454) target = $region126
                $region123: #{tpu_custom_call.1} parent=111 // loop_body
                  %v460 = vld [vmem:[%s458] sm:$0xf]
                  %461 = vst [vmem:[%s459] sm:$0xf] %v460
                  %v462 = vld [vmem:[%s458 + $0x8] sm:$0xf]
                  %463 = vst [vmem:[%s459 + $0x4] sm:$0xf] %v462
                $region124: #{tpu_custom_call.1} parent=111 // loop_footer
                  %s457 = sadd.s32 1, %s453
                $region125: #{tpu_custom_call.1} parent=111 // loop_footer_branch
                  %452 = sbr.rel target = $region121
                $region126: #{tpu_custom_call.1} parent=111 // loop_exit
                  _
              $region112: #{tpu_custom_call.1} parent=96 // pred_fallthru
                _
            $region97: #{tpu_custom_call.1} parent=92 // pred_fallthru
              _
            // Predicated region
            $region98: #{tpu_custom_call.1} parent=92 // pred_check
              _
            $region99: #{tpu_custom_call.1} parent=92 // pred_check_branch
              %427 = sbr.rel (0) target = $region101
            $region100: #{tpu_custom_call.1} parent=92 // pred_region
              loop: start=0, step=1, limit=1
              $region102: #{tpu_custom_call.1} parent=100 // loop_pre_header
                _
              $region103: #{tpu_custom_call.1} parent=100 // loop_header
                %s430 = sphi 0, %s434
                %p431 = scmp.ge.s32.totalorder %s430, 1
                %s435 = sphi %s421, %s421
                %s436 = sphi %s414, %s414
              $region104: #{tpu_custom_call.1} parent=100 // loop_header_branch
                %433 = sbr.rel (%p431) target = $region108
              $region105: #{tpu_custom_call.1} parent=100 // loop_body
                %v437 = vld [vmem:[%s435] sm:$0xf]
                %438 = vst [vmem:[%s436] sm:$0xf] %v437
                %v439 = vld [vmem:[%s435 + $0x8] sm:$0xf]
                %440 = vst [vmem:[%s436 + $0x4] sm:$0xf] %v439
              $region106: #{tpu_custom_call.1} parent=100 // loop_footer
                %s434 = sadd.s32 1, %s430
              $region107: #{tpu_custom_call.1} parent=100 // loop_footer_branch
                %429 = sbr.rel target = $region103
              $region108: #{tpu_custom_call.1} parent=100 // loop_exit
                _
            $region101: #{tpu_custom_call.1} parent=92 // pred_fallthru
              _
          $region93: #{tpu_custom_call.1} parent=88 // pred_fallthru
            _
          %464 = vnop
        $region89: #{tpu_custom_call.1} parent=43 // pred_fallthru
          _
        // Predicated region
        $region127: #{tpu_custom_call.1} parent=43 // pred_check
          %p465 = pneg %p146
        $region128: #{tpu_custom_call.1} parent=43 // pred_check_branch
          %467 = sbr.rel (%p465) target = $region130
        $region129: #{tpu_custom_call.1} parent=43 // pred_region
          %s468 = sand.u32 %s136, 1
          %s469 = scalar_lea.sflag [#allocation8], %s468
          %s470 = sand.u32 %s136, 1
          %s471 = smul.addr %s470, 8
          %s472 = scalar_lea.vmem [#allocation7], %s471
          %s473 = sadd.s32 %s31, 1
          %p474 = scmp.lt.s32.totalorder %s473, 1
          %s475 = scalar_select %p474, %s473, 1
          %s477 = ssub.s32 128, 128
          %478 = vsyncadd %s469, %s477
          %s479 = smul.addr %s30, 4
          %s480 = sadd.s32 %s475, %s479
          %s481 = smul.addr %s480, 64
          %s482 = scalar_lea.hbm %s3, %s481
          %s483 = sshll.u32 %s472, 4
          %s484 = int_to_ptr.vmem [resolvable:$true] %s483
          %489 = dma.hbm_to_vmem [thread:$0]  %s482, 128, %s484, %s469, 128, 64, 4
        $region130: #{tpu_custom_call.1} parent=43 // pred_fallthru
          _
      $region44: #{tpu_custom_call.1} parent=5 // pred_fallthru
        _
      %p490 = scmp.le.s32.totalorder 1, %s23
      %p491 = scmp.lt.s32.totalorder %s23, 5
      %p492 = pnand %p490, %p491
      %p493 = pneg %p492
      // Predicated region
      $region131: #{tpu_custom_call.1} parent=5 // pred_check
        _
      $region132: #{tpu_custom_call.1} parent=5 // pred_check_branch
        %495 = sbr.rel (%p492) target = $region134
      $region133: #{tpu_custom_call.1} parent=5 // pred_region
        %s496 = ssub.s32 %s23, 1
        // Predicated region
        $region135: #{tpu_custom_call.1} parent=133 // pred_check
          %p497 = pneg %p56
        $region136: #{tpu_custom_call.1} parent=133 // pred_check_branch
          %499 = sbr.rel (%p497) target = $region138
        $region137: #{tpu_custom_call.1} parent=133 // pred_region
          %500 = dma.done [#allocation3], 16
        $region138: #{tpu_custom_call.1} parent=133 // pred_fallthru
          _
        %s501 = sand.u32 %s71, 1
        %s502 = sand.u32 %s71, 1
        %s503 = smul.addr %s502, 8
        %s504 = scalar_lea.vmem [#allocation5], %s503
        // Predicated region
        $region139: #{tpu_custom_call.1} parent=133 // pred_check
          %p505 = pneg %p84
        $region140: #{tpu_custom_call.1} parent=133 // pred_check_branch
          %507 = sbr.rel (%p505) target = $region142
        $region141: #{tpu_custom_call.1} parent=133 // pred_region
          _
        $region142: #{tpu_custom_call.1} parent=133 // pred_fallthru
          _
        %s508 = sand.u32 %s105, 1
        %s509 = sand.u32 %s105, 1
        %s510 = smul.addr %s509, 8
        %s511 = scalar_lea.vmem [#allocation6], %s510
        // Predicated region
        $region143: #{tpu_custom_call.1} parent=133 // pred_check
          %p512 = pneg %p118
        $region144: #{tpu_custom_call.1} parent=133 // pred_check_branch
          %514 = sbr.rel (%p512) target = $region146
        $region145: #{tpu_custom_call.1} parent=133 // pred_region
          _
        $region146: #{tpu_custom_call.1} parent=133 // pred_fallthru
          _
        %s515 = sand.u32 %s139, 1
        %s516 = scalar_lea.sflag [#allocation8], %s515
        %s517 = sand.u32 %s139, 1
        %s518 = smul.addr %s517, 8
        %s519 = scalar_lea.vmem [#allocation7], %s518
        // Predicated region
        $region147: #{tpu_custom_call.1} parent=133 // pred_check
          %p520 = pneg %p152
        $region148: #{tpu_custom_call.1} parent=133 // pred_check_branch
          %522 = sbr.rel (%p520) target = $region150
        $region149: #{tpu_custom_call.1} parent=133 // pred_region
          %523 = dma.done %s516, 128
        $region150: #{tpu_custom_call.1} parent=133 // pred_fallthru
          _
        %p524 = pneg %p56
        %p525 = pneg %p53
        %s526 = sand.u32 %s71, 1
        %s527 = sand.u32 %s71, 1
        %s528 = smul.addr %s527, 8
        %s529 = scalar_lea.vmem [#allocation5], %s528
        %p530 = pneg %p84
        %p531 = pneg %p81
        %s532 = sand.u32 %s105, 1
        %s533 = sand.u32 %s105, 1
        %s534 = smul.addr %s533, 8
        %s535 = scalar_lea.vmem [#allocation6], %s534
        %p536 = pneg %p118
        %p537 = pneg %p115
        %s538 = sand.u32 %s139, 1
        %s539 = scalar_lea.sflag [#allocation8], %s538
        %s540 = sand.u32 %s139, 1
        %s541 = smul.addr %s540, 8
        %s542 = scalar_lea.vmem [#allocation7], %s541
        %p543 = pneg %p152
        %p544 = pneg %p149
        %p545 = pneg %p173
        %p546 = pneg %p170
        %p547 = pneg %p194
        %p548 = pneg %p191
        %p549 = pneg %p215
        %p550 = pneg %p212
        %p551 = pneg %p236
        %p552 = pneg %p233
        %p553 = pneg %p257
        %p554 = pneg %p254
        %p555 = pneg %p278
        %p556 = pneg %p275
        %p557 = pneg %p306
        %p558 = pneg %p303
        %s559 = sand.u32 %s293, 1
        %s560 = scalar_lea.sflag [#allocation4], %s559
        %s561 = sand.u32 %s293, 1
        %s562 = smul.addr %s561, 8
        %s563 = scalar_lea.vmem [#allocation9], %s562
        %s564 = ssub.s32 %s33, 1
        %p565 = scmp.gt.s32.totalorder %s564, 0
        %s566 = scalar_select %p565, %s564, 0
        %s567 = sadd.s32 %s33, 1
        %p568 = scmp.lt.s32.totalorder %s567, 1
        %s569 = scalar_select %p568, %s567, 1
        %v571 = vld [vmem:[%s504] sm:$0xf]
        %v572 = vld [vmem:[%s504 + $0x4] sm:$0xf]
        %v573 = vld [vmem:[%s4] sm:$0x3]
        %v574 = vld [vmem:[%s5] sm:$0xf]
        %576 = vset.pattern.permute.xlu0 0
        %577 = vperm.xlu0 %576, %v574
        %v578 = vpop.permute.xlu0 %577
        %v582 = vunpack.c.l.b16 %v571
        %v583 = vunpack.c.l.b16 %v572
        %v584 = vpack.c.b16 %v583, %v582
        %vm586 = vcmask 130048
        %v588 = vsel %vm586, %v573, 0
        %590 = vmatprep.subr.bf16.mxu0 0
        %591 = vmatpush1.bf16.msra.mxu0 %v584
        %592 = vmatprep.subr.bf16.mxu0 0
        %593 = vmatpush1.bf16.msra.mxu0 0
        %594 = vmatprep.subr.bf16.mxu0 0
        %595 = vmatpush1.bf16.msra.mxu0 0
        %596 = vmatprep.subr.bf16.mxu0 0
        %597 = vmatpush1.bf16.msra.mxu0 0
        %598 = vmatprep.subr.bf16.mxu0 0
        %599 = vmatpush1.bf16.msra.mxu0 0
        %600 = vmatprep.subr.bf16.mxu0 0
        %601 = vmatpush1.bf16.msra.mxu0 0
        %602 = vmatprep.subr.bf16.mxu0 0
        %603 = vmatpush1.bf16.msra.mxu0 0
        %604 = vmatprep.subr.bf16.mxu0 0
        %605 = vmatpush1.bf16.msra.mxu0 0
        %606 = vmatprep.subr.bf16.mxu0 0
        %607 = vmatpush1.bf16.msra.mxu0 0
        %608 = vmatprep.subr.bf16.mxu0 0
        %609 = vmatpush1.bf16.msra.mxu0 0
        %610 = vmatprep.subr.bf16.mxu0 0
        %611 = vmatpush1.bf16.msra.mxu0 0
        %612 = vmatprep.subr.bf16.mxu0 0
        %613 = vmatpush1.bf16.msra.mxu0 0
        %614 = vmatprep.subr.bf16.mxu0 0
        %615 = vmatpush1.bf16.msra.mxu0 0
        %616 = vmatprep.subr.bf16.mxu0 0
        %617 = vmatpush1.bf16.msra.mxu0 0
        %618 = vmatprep.subr.bf16.mxu0 0
        %619 = vmatpush1.bf16.msra.mxu0 0
        %620 = vmatprep.subr.bf16.mxu0 0
        %621 = vmatpush1.bf16.msra.mxu0 0
        %622 = vmatprep.mubr.bf16.mxu0 0
        %623 = vmatmul.mubr.bf16.gmra.mrb[0].mxu0 %v588
        %v624 = vpop.f32.mrb[0].mxu0
        %v625 = vadd.f32 %v578, %v624
        %v626 = vpop.f32.mrb[0].mxu0
        %v627 = vpop.f32.mrb[0].mxu0
        %v628 = vpop.f32.mrb[0].mxu0
        %629 = vdwg.mxu0
        %v630 = vmax.f32 %v625, 0.0
        %p631 = scmp.gt.s32.totalorder %s33, 0
        %v632 = vld [vmem:[%s511] sm:$0xf]
        %v633 = vld [vmem:[%s511 + $0x4] sm:$0xf]
        %v636 = vunpack.c.l.b16 %v632
        %v637 = vunpack.c.l.b16 %v633
        %v638 = vpack.c.b16 %v637, %v636
        %640 = vmatprep.subr.bf16.mxu0 0
        %641 = vmatpush1.bf16.msra.mxu0 %v638
        %642 = vmatprep.subr.bf16.mxu0 0
        %643 = vmatpush1.bf16.msra.mxu0 0
        %644 = vmatprep.subr.bf16.mxu0 0
        %645 = vmatpush1.bf16.msra.mxu0 0
        %646 = vmatprep.subr.bf16.mxu0 0
        %647 = vmatpush1.bf16.msra.mxu0 0
        %648 = vmatprep.subr.bf16.mxu0 0
        %649 = vmatpush1.bf16.msra.mxu0 0
        %650 = vmatprep.subr.bf16.mxu0 0
        %651 = vmatpush1.bf16.msra.mxu0 0
        %652 = vmatprep.subr.bf16.mxu0 0
        %653 = vmatpush1.bf16.msra.mxu0 0
        %654 = vmatprep.subr.bf16.mxu0 0
        %655 = vmatpush1.bf16.msra.mxu0 0
        %656 = vmatprep.subr.bf16.mxu0 0
        %657 = vmatpush1.bf16.msra.mxu0 0
        %658 = vmatprep.subr.bf16.mxu0 0
        %659 = vmatpush1.bf16.msra.mxu0 0
        %660 = vmatprep.subr.bf16.mxu0 0
        %661 = vmatpush1.bf16.msra.mxu0 0
        %662 = vmatprep.subr.bf16.mxu0 0
        %663 = vmatpush1.bf16.msra.mxu0 0
        %664 = vmatprep.subr.bf16.mxu0 0
        %665 = vmatpush1.bf16.msra.mxu0 0
        %666 = vmatprep.subr.bf16.mxu0 0
        %667 = vmatpush1.bf16.msra.mxu0 0
        %668 = vmatprep.subr.bf16.mxu0 0
        %669 = vmatpush1.bf16.msra.mxu0 0
        %670 = vmatprep.subr.bf16.mxu0 0
        %671 = vmatpush1.bf16.msra.mxu0 0
        %672 = vmatprep.mubr.bf16.mxu0 0
        %673 = vmatmul.mubr.bf16.gmra.mrb[0].mxu0 %v588
        %v674 = vpop.f32.mrb[0].mxu0
        %v675 = vadd.f32 %v578, %v674
        %v676 = vpop.f32.mrb[0].mxu0
        %v677 = vpop.f32.mrb[0].mxu0
        %v678 = vpop.f32.mrb[0].mxu0
        %679 = vdwg.mxu0
        %v680 = vmax.f32 %v675, 0.0
        %s681 = scalar_select %p631, 1, 0
        %v682 = vstv %s681
        %vm683 = vcmp.eq.s32.totalorder %v682, 1
        %v684 = vsel %vm683, %v680, 0.0
        %p685 = scmp.lt.s32.totalorder %s33, 1
        %v686 = vld [vmem:[%s519] sm:$0xf]
        %v687 = vld [vmem:[%s519 + $0x4] sm:$0xf]
        %v690 = vunpack.c.l.b16 %v686
        %v691 = vunpack.c.l.b16 %v687
        %v692 = vpack.c.b16 %v691, %v690
        %694 = vmatprep.subr.bf16.mxu0 0
        %695 = vmatpush1.bf16.msra.mxu0 %v692
        %696 = vmatprep.subr.bf16.mxu0 0
        %697 = vmatpush1.bf16.msra.mxu0 0
        %698 = vmatprep.subr.bf16.mxu0 0
        %699 = vmatpush1.bf16.msra.mxu0 0
        %700 = vmatprep.subr.bf16.mxu0 0
        %701 = vmatpush1.bf16.msra.mxu0 0
        %702 = vmatprep.subr.bf16.mxu0 0
        %703 = vmatpush1.bf16.msra.mxu0 0
        %704 = vmatprep.subr.bf16.mxu0 0
        %705 = vmatpush1.bf16.msra.mxu0 0
        %706 = vmatprep.subr.bf16.mxu0 0
        %707 = vmatpush1.bf16.msra.mxu0 0
        %708 = vmatprep.subr.bf16.mxu0 0
        %709 = vmatpush1.bf16.msra.mxu0 0
        %710 = vmatprep.subr.bf16.mxu0 0
        %711 = vmatpush1.bf16.msra.mxu0 0
        %712 = vmatprep.subr.bf16.mxu0 0
        %713 = vmatpush1.bf16.msra.mxu0 0
        %714 = vmatprep.subr.bf16.mxu0 0
        %715 = vmatpush1.bf16.msra.mxu0 0
        %716 = vmatprep.subr.bf16.mxu0 0
        %717 = vmatpush1.bf16.msra.mxu0 0
        %718 = vmatprep.subr.bf16.mxu0 0
        %719 = vmatpush1.bf16.msra.mxu0 0
        %720 = vmatprep.subr.bf16.mxu0 0
        %721 = vmatpush1.bf16.msra.mxu0 0
        %722 = vmatprep.subr.bf16.mxu0 0
        %723 = vmatpush1.bf16.msra.mxu0 0
        %724 = vmatprep.subr.bf16.mxu0 0
        %725 = vmatpush1.bf16.msra.mxu0 0
        %726 = vmatprep.mubr.bf16.mxu0 0
        %727 = vmatmul.mubr.bf16.gmra.mrb[0].mxu0 %v588
        %v728 = vpop.f32.mrb[0].mxu0
        %v729 = vadd.f32 %v578, %v728
        %v730 = vpop.f32.mrb[0].mxu0
        %v731 = vpop.f32.mrb[0].mxu0
        %v732 = vpop.f32.mrb[0].mxu0
        %733 = vdwg.mxu0
        %v734 = vmax.f32 %v729, 0.0
        %s735 = scalar_select %p685, 1, 0
        %v736 = vstv %s735
        %vm737 = vcmp.eq.s32.totalorder %v736, 1
        %v738 = vsel %vm737, %v734, 0.0
        %v739 = vld [vmem:[#allocation2] sm:$0x1]
        %vm740 = vcmp.ge.s32.totalorder %v739, 1
        %vm741 = vcmp.le.s32.totalorder %v739, 14
        %742 = vrot.lane.b32.xlu0 %v684, 17
        %v743 = vpop.permute.xlu0 %742
        %744 = vrot.lane.b32.xlu0 %v630, 17
        %v745 = vpop.permute.xlu0 %744
        %v746 = vlaneseq
        %v747 = vand.u32 %v746, 127
        %vm748 = vcmp.lt.s32.totalorder %v747, 17
        %v749 = vsel %vm748, %v743, %v745
        %v750 = vsel %vm740, 1, 0
        %v751 = vlaneseq
        %v752 = vshrl.u32 %v751, 7
        %v753 = vsub.s32 0, %v752
        %v754 = vrot.slane %v750, %v753
        %vm755 = vcmp.eq.s32.totalorder %v754, 1
        %v756 = vsel %vm755, %v749, 0.0
        %v757 = vld [vmem:[%s6] sm:$0x3]
        %v758 = vpack.c.bf16 %v756, %v756
        %759 = vrot.lane.b32.xlu0 %v684, 16
        %v760 = vpop.permute.xlu0 %759
        %761 = vrot.lane.b32.xlu0 %v630, 16
        %v762 = vpop.permute.xlu0 %761
        %vm763 = vcmp.lt.s32.totalorder %v747, 16
        %v764 = vsel %vm763, %v760, %v762
        %s765 = scalar_lea.vmem %s6, 2
        %v766 = vld [vmem:[%s765] sm:$0x3]
        %v767 = vpack.c.bf16 %v764, %v764
        %vm768 = vcmask 31744
        %v770 = vsel %vm768, %v766, 0
        %vm772 = vcmask 1041408
        %v774 = vsel %vm772, %v767, 0
        %776 = vmatprep.subr.bf16.mxu0 0
        %777 = vmatpush1.bf16.msra.mxu0 %v774
        %778 = vmatprep.subr.bf16.mxu0 0
        %779 = vmatpush1.bf16.msra.mxu0 0
        %780 = vmatprep.subr.bf16.mxu0 0
        %781 = vmatpush1.bf16.msra.mxu0 0
        %782 = vmatprep.subr.bf16.mxu0 0
        %783 = vmatpush1.bf16.msra.mxu0 0
        %784 = vmatprep.subr.bf16.mxu0 0
        %785 = vmatpush1.bf16.msra.mxu0 0
        %786 = vmatprep.subr.bf16.mxu0 0
        %787 = vmatpush1.bf16.msra.mxu0 0
        %788 = vmatprep.subr.bf16.mxu0 0
        %789 = vmatpush1.bf16.msra.mxu0 0
        %790 = vmatprep.subr.bf16.mxu0 0
        %791 = vmatpush1.bf16.msra.mxu0 0
        %792 = vmatprep.subr.bf16.mxu0 0
        %793 = vmatpush1.bf16.msra.mxu0 0
        %794 = vmatprep.subr.bf16.mxu0 0
        %795 = vmatpush1.bf16.msra.mxu0 0
        %796 = vmatprep.subr.bf16.mxu0 0
        %797 = vmatpush1.bf16.msra.mxu0 0
        %798 = vmatprep.subr.bf16.mxu0 0
        %799 = vmatpush1.bf16.msra.mxu0 0
        %800 = vmatprep.subr.bf16.mxu0 0
        %801 = vmatpush1.bf16.msra.mxu0 0
        %802 = vmatprep.subr.bf16.mxu0 0
        %803 = vmatpush1.bf16.msra.mxu0 0
        %804 = vmatprep.subr.bf16.mxu0 0
        %805 = vmatpush1.bf16.msra.mxu0 0
        %806 = vmatprep.subr.bf16.mxu0 0
        %807 = vmatpush1.bf16.msra.mxu0 0
        %808 = vmatprep.mubr.bf16.mxu0 0
        %809 = vmatmul.mubr.bf16.gmra.mrb[0].mxu0 %v770
        %v810 = vpop.f32.mrb[0].mxu0
        %v811 = vadd.f32 0.0, %v810
        %v812 = vpop.f32.mrb[0].mxu0
        %v813 = vpop.f32.mrb[0].mxu0
        %v814 = vpop.f32.mrb[0].mxu0
        %815 = vdwg.mxu0
        %v817 = vsel %vm768, %v757, 0
        %v820 = vsel %vm772, %v758, 0
        %822 = vmatprep.subr.bf16.mxu0 0
        %823 = vmatpush1.bf16.msra.mxu0 %v820
        %824 = vmatprep.subr.bf16.mxu0 0
        %825 = vmatpush1.bf16.msra.mxu0 0
        %826 = vmatprep.subr.bf16.mxu0 0
        %827 = vmatpush1.bf16.msra.mxu0 0
        %828 = vmatprep.subr.bf16.mxu0 0
        %829 = vmatpush1.bf16.msra.mxu0 0
        %830 = vmatprep.subr.bf16.mxu0 0
        %831 = vmatpush1.bf16.msra.mxu0 0
        %832 = vmatprep.subr.bf16.mxu0 0
        %833 = vmatpush1.bf16.msra.mxu0 0
        %834 = vmatprep.subr.bf16.mxu0 0
        %835 = vmatpush1.bf16.msra.mxu0 0
        %836 = vmatprep.subr.bf16.mxu0 0
        %837 = vmatpush1.bf16.msra.mxu0 0
        %838 = vmatprep.subr.bf16.mxu0 0
        %839 = vmatpush1.bf16.msra.mxu0 0
        %840 = vmatprep.subr.bf16.mxu0 0
        %841 = vmatpush1.bf16.msra.mxu0 0
        %842 = vmatprep.subr.bf16.mxu0 0
        %843 = vmatpush1.bf16.msra.mxu0 0
        %844 = vmatprep.subr.bf16.mxu0 0
        %845 = vmatpush1.bf16.msra.mxu0 0
        %846 = vmatprep.subr.bf16.mxu0 0
        %847 = vmatpush1.bf16.msra.mxu0 0
        %848 = vmatprep.subr.bf16.mxu0 0
        %849 = vmatpush1.bf16.msra.mxu0 0
        %850 = vmatprep.subr.bf16.mxu0 0
        %851 = vmatpush1.bf16.msra.mxu0 0
        %852 = vmatprep.subr.bf16.mxu0 0
        %853 = vmatpush1.bf16.msra.mxu0 0
        %854 = vmatprep.mubr.bf16.mxu0 0
        %855 = vmatmul.mubr.bf16.gmra.mrb[0].mxu0 %v817
        %v856 = vpop.f32.mrb[0].mxu0
        %v857 = vadd.f32 %v811, %v856
        %v858 = vpop.f32.mrb[0].mxu0
        %v859 = vpop.f32.mrb[0].mxu0
        %v860 = vpop.f32.mrb[0].mxu0
        %861 = vdwg.mxu0
        %862 = vrot.lane.b32.xlu0 %v684, 15
        %v863 = vpop.permute.xlu0 %862
        %864 = vrot.lane.b32.xlu0 %v630, 15
        %v865 = vpop.permute.xlu0 %864
        %vm866 = vcmp.lt.s32.totalorder %v747, 15
        %v867 = vsel %vm866, %v863, %v865
        %v868 = vsel %vm741, 1, 0
        %v869 = vlaneseq
        %v870 = vshrl.u32 %v869, 7
        %v871 = vsub.s32 0, %v870
        %v872 = vrot.slane %v868, %v871
        %vm873 = vcmp.eq.s32.totalorder %v872, 1
        %v874 = vsel %vm873, %v867, 0.0
        %s875 = scalar_lea.vmem %s6, 4
        %v876 = vld [vmem:[%s875] sm:$0x3]
        %v877 = vpack.c.bf16 %v874, %v874
        %v879 = vsel %vm768, %v876, 0
        %v882 = vsel %vm772, %v877, 0
        %884 = vmatprep.subr.bf16.mxu0 0
        %885 = vmatpush1.bf16.msra.mxu0 %v882
        %886 = vmatprep.subr.bf16.mxu0 0
        %887 = vmatpush1.bf16.msra.mxu0 0
        %888 = vmatprep.subr.bf16.mxu0 0
        %889 = vmatpush1.bf16.msra.mxu0 0
        %890 = vmatprep.subr.bf16.mxu0 0
        %891 = vmatpush1.bf16.msra.mxu0 0
        %892 = vmatprep.subr.bf16.mxu0 0
        %893 = vmatpush1.bf16.msra.mxu0 0
        %894 = vmatprep.subr.bf16.mxu0 0
        %895 = vmatpush1.bf16.msra.mxu0 0
        %896 = vmatprep.subr.bf16.mxu0 0
        %897 = vmatpush1.bf16.msra.mxu0 0
        %898 = vmatprep.subr.bf16.mxu0 0
        %899 = vmatpush1.bf16.msra.mxu0 0
        %900 = vmatprep.subr.bf16.mxu0 0
        %901 = vmatpush1.bf16.msra.mxu0 0
        %902 = vmatprep.subr.bf16.mxu0 0
        %903 = vmatpush1.bf16.msra.mxu0 0
        %904 = vmatprep.subr.bf16.mxu0 0
        %905 = vmatpush1.bf16.msra.mxu0 0
        %906 = vmatprep.subr.bf16.mxu0 0
        %907 = vmatpush1.bf16.msra.mxu0 0
        %908 = vmatprep.subr.bf16.mxu0 0
        %909 = vmatpush1.bf16.msra.mxu0 0
        %910 = vmatprep.subr.bf16.mxu0 0
        %911 = vmatpush1.bf16.msra.mxu0 0
        %912 = vmatprep.subr.bf16.mxu0 0
        %913 = vmatpush1.bf16.msra.mxu0 0
        %914 = vmatprep.subr.bf16.mxu0 0
        %915 = vmatpush1.bf16.msra.mxu0 0
        %916 = vmatprep.mubr.bf16.mxu0 0
        %917 = vmatmul.mubr.bf16.gmra.mrb[0].mxu0 %v879
        %v918 = vpop.f32.mrb[0].mxu0
        %v919 = vadd.f32 0.0, %v918
        %v920 = vpop.f32.mrb[0].mxu0
        %v921 = vpop.f32.mrb[0].mxu0
        %v922 = vpop.f32.mrb[0].mxu0
        %923 = vdwg.mxu0
        %v924 = vadd.f32 %v857, %v919
        %925 = vrot.lane.b32.xlu0 %v684, 1
        %v926 = vpop.permute.xlu0 %925
        %927 = vrot.lane.b32.xlu0 %v630, 1
        %v928 = vpop.permute.xlu0 %927
        %vm929 = vcmp.lt.s32.totalorder %v747, 1
        %v930 = vsel %vm929, %v926, %v928
        %v931 = vsel %vm755, %v930, 0.0
        %s932 = scalar_lea.vmem %s6, 6
        %v933 = vld [vmem:[%s932] sm:$0x3]
        %v934 = vpack.c.bf16 %v931, %v931
        %v936 = vsel %vm768, %v933, 0
        %v939 = vsel %vm772, %v934, 0
        %941 = vmatprep.subr.bf16.mxu0 0
        %942 = vmatpush1.bf16.msra.mxu0 %v939
        %943 = vmatprep.subr.bf16.mxu0 0
        %944 = vmatpush1.bf16.msra.mxu0 0
        %945 = vmatprep.subr.bf16.mxu0 0
        %946 = vmatpush1.bf16.msra.mxu0 0
        %947 = vmatprep.subr.bf16.mxu0 0
        %948 = vmatpush1.bf16.msra.mxu0 0
        %949 = vmatprep.subr.bf16.mxu0 0
        %950 = vmatpush1.bf16.msra.mxu0 0
        %951 = vmatprep.subr.bf16.mxu0 0
        %952 = vmatpush1.bf16.msra.mxu0 0
        %953 = vmatprep.subr.bf16.mxu0 0
        %954 = vmatpush1.bf16.msra.mxu0 0
        %955 = vmatprep.subr.bf16.mxu0 0
        %956 = vmatpush1.bf16.msra.mxu0 0
        %957 = vmatprep.subr.bf16.mxu0 0
        %958 = vmatpush1.bf16.msra.mxu0 0
        %959 = vmatprep.subr.bf16.mxu0 0
        %960 = vmatpush1.bf16.msra.mxu0 0
        %961 = vmatprep.subr.bf16.mxu0 0
        %962 = vmatpush1.bf16.msra.mxu0 0
        %963 = vmatprep.subr.bf16.mxu0 0
        %964 = vmatpush1.bf16.msra.mxu0 0
        %965 = vmatprep.subr.bf16.mxu0 0
        %966 = vmatpush1.bf16.msra.mxu0 0
        %967 = vmatprep.subr.bf16.mxu0 0
        %968 = vmatpush1.bf16.msra.mxu0 0
        %969 = vmatprep.subr.bf16.mxu0 0
        %970 = vmatpush1.bf16.msra.mxu0 0
        %971 = vmatprep.subr.bf16.mxu0 0
        %972 = vmatpush1.bf16.msra.mxu0 0
        %973 = vmatprep.mubr.bf16.mxu0 0
        %974 = vmatmul.mubr.bf16.gmra.mrb[0].mxu0 %v936
        %v975 = vpop.f32.mrb[0].mxu0
        %v976 = vadd.f32 0.0, %v975
        %v977 = vpop.f32.mrb[0].mxu0
        %v978 = vpop.f32.mrb[0].mxu0
        %v979 = vpop.f32.mrb[0].mxu0
        %980 = vdwg.mxu0
        %v981 = vadd.f32 %v924, %v976
        %s982 = scalar_lea.vmem %s6, 8
        %v983 = vld [vmem:[%s982] sm:$0x3]
        %v984 = vpack.c.bf16 %v630, %v630
        %v986 = vsel %vm768, %v983, 0
        %v989 = vsel %vm772, %v984, 0
        %991 = vmatprep.subr.bf16.mxu0 0
        %992 = vmatpush1.bf16.msra.mxu0 %v989
        %993 = vmatprep.subr.bf16.mxu0 0
        %994 = vmatpush1.bf16.msra.mxu0 0
        %995 = vmatprep.subr.bf16.mxu0 0
        %996 = vmatpush1.bf16.msra.mxu0 0
        %997 = vmatprep.subr.bf16.mxu0 0
        %998 = vmatpush1.bf16.msra.mxu0 0
        %999 = vmatprep.subr.bf16.mxu0 0
        %1000 = vmatpush1.bf16.msra.mxu0 0
        %1001 = vmatprep.subr.bf16.mxu0 0
        %1002 = vmatpush1.bf16.msra.mxu0 0
        %1003 = vmatprep.subr.bf16.mxu0 0
        %1004 = vmatpush1.bf16.msra.mxu0 0
        %1005 = vmatprep.subr.bf16.mxu0 0
        %1006 = vmatpush1.bf16.msra.mxu0 0
        %1007 = vmatprep.subr.bf16.mxu0 0
        %1008 = vmatpush1.bf16.msra.mxu0 0
        %1009 = vmatprep.subr.bf16.mxu0 0
        %1010 = vmatpush1.bf16.msra.mxu0 0
        %1011 = vmatprep.subr.bf16.mxu0 0
        %1012 = vmatpush1.bf16.msra.mxu0 0
        %1013 = vmatprep.subr.bf16.mxu0 0
        %1014 = vmatpush1.bf16.msra.mxu0 0
        %1015 = vmatprep.subr.bf16.mxu0 0
        %1016 = vmatpush1.bf16.msra.mxu0 0
        %1017 = vmatprep.subr.bf16.mxu0 0
        %1018 = vmatpush1.bf16.msra.mxu0 0
        %1019 = vmatprep.subr.bf16.mxu0 0
        %1020 = vmatpush1.bf16.msra.mxu0 0
        %1021 = vmatprep.subr.bf16.mxu0 0
        %1022 = vmatpush1.bf16.msra.mxu0 0
        %1023 = vmatprep.mubr.bf16.mxu0 0
        %1024 = vmatmul.mubr.bf16.gmra.mrb[0].mxu0 %v986
        %v1025 = vpop.f32.mrb[0].mxu0
        %v1026 = vadd.f32 0.0, %v1025
        %v1027 = vpop.f32.mrb[0].mxu0
        %v1028 = vpop.f32.mrb[0].mxu0
        %v1029 = vpop.f32.mrb[0].mxu0
        %1030 = vdwg.mxu0
        %v1031 = vadd.f32 %v981, %v1026
        %1032 = vrot.lane.b32.xlu0 %v630, 127
        %v1033 = vpop.permute.xlu0 %1032
        %1034 = vrot.lane.b32.xlu0 %v738, 127
        %v1035 = vpop.permute.xlu0 %1034
        %vm1036 = vcmp.lt.s32.totalorder %v747, 127
        %v1037 = vsel %vm1036, %v1033, %v1035
        %v1038 = vsel %vm873, %v1037, 0.0
        %s1039 = scalar_lea.vmem %s6, 10
        %v1040 = vld [vmem:[%s1039] sm:$0x3]
        %v1041 = vpack.c.bf16 %v1038, %v1038
        %v1043 = vsel %vm768, %v1040, 0
        %v1046 = vsel %vm772, %v1041, 0
        %1048 = vmatprep.subr.bf16.mxu0 0
        %1049 = vmatpush1.bf16.msra.mxu0 %v1046
        %1050 = vmatprep.subr.bf16.mxu0 0
        %1051 = vmatpush1.bf16.msra.mxu0 0
        %1052 = vmatprep.subr.bf16.mxu0 0
        %1053 = vmatpush1.bf16.msra.mxu0 0
        %1054 = vmatprep.subr.bf16.mxu0 0
        %1055 = vmatpush1.bf16.msra.mxu0 0
        %1056 = vmatprep.subr.bf16.mxu0 0
        %1057 = vmatpush1.bf16.msra.mxu0 0
        %1058 = vmatprep.subr.bf16.mxu0 0
        %1059 = vmatpush1.bf16.msra.mxu0 0
        %1060 = vmatprep.subr.bf16.mxu0 0
        %1061 = vmatpush1.bf16.msra.mxu0 0
        %1062 = vmatprep.subr.bf16.mxu0 0
        %1063 = vmatpush1.bf16.msra.mxu0 0
        %1064 = vmatprep.subr.bf16.mxu0 0
        %1065 = vmatpush1.bf16.msra.mxu0 0
        %1066 = vmatprep.subr.bf16.mxu0 0
        %1067 = vmatpush1.bf16.msra.mxu0 0
        %1068 = vmatprep.subr.bf16.mxu0 0
        %1069 = vmatpush1.bf16.msra.mxu0 0
        %1070 = vmatprep.subr.bf16.mxu0 0
        %1071 = vmatpush1.bf16.msra.mxu0 0
        %1072 = vmatprep.subr.bf16.mxu0 0
        %1073 = vmatpush1.bf16.msra.mxu0 0
        %1074 = vmatprep.subr.bf16.mxu0 0
        %1075 = vmatpush1.bf16.msra.mxu0 0
        %1076 = vmatprep.subr.bf16.mxu0 0
        %1077 = vmatpush1.bf16.msra.mxu0 0
        %1078 = vmatprep.subr.bf16.mxu0 0
        %1079 = vmatpush1.bf16.msra.mxu0 0
        %1080 = vmatprep.mubr.bf16.mxu0 0
        %1081 = vmatmul.mubr.bf16.gmra.mrb[0].mxu0 %v1043
        %v1082 = vpop.f32.mrb[0].mxu0
        %v1083 = vadd.f32 0.0, %v1082
        %v1084 = vpop.f32.mrb[0].mxu0
        %v1085 = vpop.f32.mrb[0].mxu0
        %v1086 = vpop.f32.mrb[0].mxu0
        %1087 = vdwg.mxu0
        %v1088 = vadd.f32 %v1031, %v1083
        %1089 = vrot.lane.b32.xlu0 %v630, 113
        %v1090 = vpop.permute.xlu0 %1089
        %1091 = vrot.lane.b32.xlu0 %v738, 113
        %v1092 = vpop.permute.xlu0 %1091
        %vm1093 = vcmp.lt.s32.totalorder %v747, 113
        %v1094 = vsel %vm1093, %v1090, %v1092
        %v1095 = vsel %vm755, %v1094, 0.0
        %s1096 = scalar_lea.vmem %s6, 12
        %v1097 = vld [vmem:[%s1096] sm:$0x3]
        %v1098 = vpack.c.bf16 %v1095, %v1095
        %v1100 = vsel %vm768, %v1097, 0
        %v1103 = vsel %vm772, %v1098, 0
        %1105 = vmatprep.subr.bf16.mxu0 0
        %1106 = vmatpush1.bf16.msra.mxu0 %v1103
        %1107 = vmatprep.subr.bf16.mxu0 0
        %1108 = vmatpush1.bf16.msra.mxu0 0
        %1109 = vmatprep.subr.bf16.mxu0 0
        %1110 = vmatpush1.bf16.msra.mxu0 0
        %1111 = vmatprep.subr.bf16.mxu0 0
        %1112 = vmatpush1.bf16.msra.mxu0 0
        %1113 = vmatprep.subr.bf16.mxu0 0
        %1114 = vmatpush1.bf16.msra.mxu0 0
        %1115 = vmatprep.subr.bf16.mxu0 0
        %1116 = vmatpush1.bf16.msra.mxu0 0
        %1117 = vmatprep.subr.bf16.mxu0 0
        %1118 = vmatpush1.bf16.msra.mxu0 0
        %1119 = vmatprep.subr.bf16.mxu0 0
        %1120 = vmatpush1.bf16.msra.mxu0 0
        %1121 = vmatprep.subr.bf16.mxu0 0
        %1122 = vmatpush1.bf16.msra.mxu0 0
        %1123 = vmatprep.subr.bf16.mxu0 0
        %1124 = vmatpush1.bf16.msra.mxu0 0
        %1125 = vmatprep.subr.bf16.mxu0 0
        %1126 = vmatpush1.bf16.msra.mxu0 0
        %1127 = vmatprep.subr.bf16.mxu0 0
        %1128 = vmatpush1.bf16.msra.mxu0 0
        %1129 = vmatprep.subr.bf16.mxu0 0
        %1130 = vmatpush1.bf16.msra.mxu0 0
        %1131 = vmatprep.subr.bf16.mxu0 0
        %1132 = vmatpush1.bf16.msra.mxu0 0
        %1133 = vmatprep.subr.bf16.mxu0 0
        %1134 = vmatpush1.bf16.msra.mxu0 0
        %1135 = vmatprep.subr.bf16.mxu0 0
        %1136 = vmatpush1.bf16.msra.mxu0 0
        %1137 = vmatprep.mubr.bf16.mxu0 0
        %1138 = vmatmul.mubr.bf16.gmra.mrb[0].mxu0 %v1100
        %v1139 = vpop.f32.mrb[0].mxu0
        %v1140 = vadd.f32 0.0, %v1139
        %v1141 = vpop.f32.mrb[0].mxu0
        %v1142 = vpop.f32.mrb[0].mxu0
        %v1143 = vpop.f32.mrb[0].mxu0
        %1144 = vdwg.mxu0
        %v1145 = vadd.f32 %v1088, %v1140
        %1146 = vrot.lane.b32.xlu0 %v630, 112
        %v1147 = vpop.permute.xlu0 %1146
        %1148 = vrot.lane.b32.xlu0 %v738, 112
        %v1149 = vpop.permute.xlu0 %1148
        %vm1150 = vcmp.lt.s32.totalorder %v747, 112
        %v1151 = vsel %vm1150, %v1147, %v1149
        %s1152 = scalar_lea.vmem %s6, 14
        %v1153 = vld [vmem:[%s1152] sm:$0x3]
        %v1154 = vpack.c.bf16 %v1151, %v1151
        %v1156 = vsel %vm768, %v1153, 0
        %v1159 = vsel %vm772, %v1154, 0
        %1161 = vmatprep.subr.bf16.mxu0 0
        %1162 = vmatpush1.bf16.msra.mxu0 %v1159
        %1163 = vmatprep.subr.bf16.mxu0 0
        %1164 = vmatpush1.bf16.msra.mxu0 0
        %1165 = vmatprep.subr.bf16.mxu0 0
        %1166 = vmatpush1.bf16.msra.mxu0 0
        %1167 = vmatprep.subr.bf16.mxu0 0
        %1168 = vmatpush1.bf16.msra.mxu0 0
        %1169 = vmatprep.subr.bf16.mxu0 0
        %1170 = vmatpush1.bf16.msra.mxu0 0
        %1171 = vmatprep.subr.bf16.mxu0 0
        %1172 = vmatpush1.bf16.msra.mxu0 0
        %1173 = vmatprep.subr.bf16.mxu0 0
        %1174 = vmatpush1.bf16.msra.mxu0 0
        %1175 = vmatprep.subr.bf16.mxu0 0
        %1176 = vmatpush1.bf16.msra.mxu0 0
        %1177 = vmatprep.subr.bf16.mxu0 0
        %1178 = vmatpush1.bf16.msra.mxu0 0
        %1179 = vmatprep.subr.bf16.mxu0 0
        %1180 = vmatpush1.bf16.msra.mxu0 0
        %1181 = vmatprep.subr.bf16.mxu0 0
        %1182 = vmatpush1.bf16.msra.mxu0 0
        %1183 = vmatprep.subr.bf16.mxu0 0
        %1184 = vmatpush1.bf16.msra.mxu0 0
        %1185 = vmatprep.subr.bf16.mxu0 0
        %1186 = vmatpush1.bf16.msra.mxu0 0
        %1187 = vmatprep.subr.bf16.mxu0 0
        %1188 = vmatpush1.bf16.msra.mxu0 0
        %1189 = vmatprep.subr.bf16.mxu0 0
        %1190 = vmatpush1.bf16.msra.mxu0 0
        %1191 = vmatprep.subr.bf16.mxu0 0
        %1192 = vmatpush1.bf16.msra.mxu0 0
        %1193 = vmatprep.mubr.bf16.mxu0 0
        %1194 = vmatmul.mubr.bf16.gmra.mrb[0].mxu0 %v1156
        %v1195 = vpop.f32.mrb[0].mxu0
        %v1196 = vadd.f32 0.0, %v1195
        %v1197 = vpop.f32.mrb[0].mxu0
        %v1198 = vpop.f32.mrb[0].mxu0
        %v1199 = vpop.f32.mrb[0].mxu0
        %1200 = vdwg.mxu0
        %v1201 = vadd.f32 %v1145, %v1196
        %1202 = vrot.lane.b32.xlu0 %v630, 111
        %v1203 = vpop.permute.xlu0 %1202
        %1204 = vrot.lane.b32.xlu0 %v738, 111
        %v1205 = vpop.permute.xlu0 %1204
        %vm1206 = vcmp.lt.s32.totalorder %v747, 111
        %v1207 = vsel %vm1206, %v1203, %v1205
        %v1208 = vsel %vm873, %v1207, 0.0
        %s1209 = scalar_lea.vmem %s6, 16
        %v1210 = vld [vmem:[%s1209] sm:$0x3]
        %v1211 = vpack.c.bf16 %v1208, %v1208
        %v1213 = vsel %vm768, %v1210, 0
        %v1216 = vsel %vm772, %v1211, 0
        %1218 = vmatprep.subr.bf16.mxu0 0
        %1219 = vmatpush1.bf16.msra.mxu0 %v1216
        %1220 = vmatprep.subr.bf16.mxu0 0
        %1221 = vmatpush1.bf16.msra.mxu0 0
        %1222 = vmatprep.subr.bf16.mxu0 0
        %1223 = vmatpush1.bf16.msra.mxu0 0
        %1224 = vmatprep.subr.bf16.mxu0 0
        %1225 = vmatpush1.bf16.msra.mxu0 0
        %1226 = vmatprep.subr.bf16.mxu0 0
        %1227 = vmatpush1.bf16.msra.mxu0 0
        %1228 = vmatprep.subr.bf16.mxu0 0
        %1229 = vmatpush1.bf16.msra.mxu0 0
        %1230 = vmatprep.subr.bf16.mxu0 0
        %1231 = vmatpush1.bf16.msra.mxu0 0
        %1232 = vmatprep.subr.bf16.mxu0 0
        %1233 = vmatpush1.bf16.msra.mxu0 0
        %1234 = vmatprep.subr.bf16.mxu0 0
        %1235 = vmatpush1.bf16.msra.mxu0 0
        %1236 = vmatprep.subr.bf16.mxu0 0
        %1237 = vmatpush1.bf16.msra.mxu0 0
        %1238 = vmatprep.subr.bf16.mxu0 0
        %1239 = vmatpush1.bf16.msra.mxu0 0
        %1240 = vmatprep.subr.bf16.mxu0 0
        %1241 = vmatpush1.bf16.msra.mxu0 0
        %1242 = vmatprep.subr.bf16.mxu0 0
        %1243 = vmatpush1.bf16.msra.mxu0 0
        %1244 = vmatprep.subr.bf16.mxu0 0
        %1245 = vmatpush1.bf16.msra.mxu0 0
        %1246 = vmatprep.subr.bf16.mxu0 0
        %1247 = vmatpush1.bf16.msra.mxu0 0
        %1248 = vmatprep.subr.bf16.mxu0 0
        %1249 = vmatpush1.bf16.msra.mxu0 0
        %1250 = vmatprep.mubr.bf16.mxu0 0
        %1251 = vmatmul.mubr.bf16.gmra.mrb[0].mxu0 %v1213
        %v1252 = vpop.f32.mrb[0].mxu0
        %v1253 = vadd.f32 0.0, %v1252
        %v1254 = vpop.f32.mrb[0].mxu0
        %v1255 = vpop.f32.mrb[0].mxu0
        %v1256 = vpop.f32.mrb[0].mxu0
        %1257 = vdwg.mxu0
        %v1258 = vadd.f32 %v1201, %v1253
        %v1259 = vld [vmem:[%s7] sm:$0xf]
        %1261 = vset.pattern.permute.xlu0 0
        %1262 = vperm.xlu0 %1261, %v1259
        %v1263 = vpop.permute.xlu0 %1262
        %v1265 = vadd.f32 %v1258, %v1263
        %v1266 = vmax.f32 %v1265, 0.0
        %v1267 = vld [vmem:[%s8] sm:$0xf]
        %v1268 = vld [vmem:[%s8 + $0x4] sm:$0xf]
        %v1269 = vpack.c.bf16 %v1266, %v1266
        %v1270 = vld [vmem:[%s9] sm:$0xff]
        %v1271 = vld [vmem:[%s9 + $0x8] sm:$0xff]
        %1273 = vset.pattern.permute.xlu0 0
        %1274 = vperm.xlu0 %1273, %v1270
        %v1275 = vpop.permute.xlu0 %1274
        %1278 = vset.pattern.permute.xlu0 0
        %1279 = vperm.xlu0 %1278, %v1271
        %v1280 = vpop.permute.xlu0 %1279
        %v1284 = vunpack.c.l.b16 %v1267
        %v1285 = vunpack.c.l.b16 %v1268
        %v1286 = vpack.c.b16 %v1285, %v1284
        %v1288 = vsel %vm768, %v1286, 0
        %v1291 = vsel %vm772, %v1269, 0
        %1293 = vmatprep.subr.bf16.mxu0 0
        %1294 = vmatpush1.bf16.msra.mxu0 %v1291
        %1295 = vmatprep.subr.bf16.mxu0 0
        %1296 = vmatpush1.bf16.msra.mxu0 0
        %1297 = vmatprep.subr.bf16.mxu0 0
        %1298 = vmatpush1.bf16.msra.mxu0 0
        %1299 = vmatprep.subr.bf16.mxu0 0
        %1300 = vmatpush1.bf16.msra.mxu0 0
        %1301 = vmatprep.subr.bf16.mxu0 0
        %1302 = vmatpush1.bf16.msra.mxu0 0
        %1303 = vmatprep.subr.bf16.mxu0 0
        %1304 = vmatpush1.bf16.msra.mxu0 0
        %1305 = vmatprep.subr.bf16.mxu0 0
        %1306 = vmatpush1.bf16.msra.mxu0 0
        %1307 = vmatprep.subr.bf16.mxu0 0
        %1308 = vmatpush1.bf16.msra.mxu0 0
        %1309 = vmatprep.subr.bf16.mxu0 0
        %1310 = vmatpush1.bf16.msra.mxu0 0
        %1311 = vmatprep.subr.bf16.mxu0 0
        %1312 = vmatpush1.bf16.msra.mxu0 0
        %1313 = vmatprep.subr.bf16.mxu0 0
        %1314 = vmatpush1.bf16.msra.mxu0 0
        %1315 = vmatprep.subr.bf16.mxu0 0
        %1316 = vmatpush1.bf16.msra.mxu0 0
        %1317 = vmatprep.subr.bf16.mxu0 0
        %1318 = vmatpush1.bf16.msra.mxu0 0
        %1319 = vmatprep.subr.bf16.mxu0 0
        %1320 = vmatpush1.bf16.msra.mxu0 0
        %1321 = vmatprep.subr.bf16.mxu0 0
        %1322 = vmatpush1.bf16.msra.mxu0 0
        %1323 = vmatprep.subr.bf16.mxu0 0
        %1324 = vmatpush1.bf16.msra.mxu0 0
        %1325 = vmatprep.mubr.bf16.mxu0 0
        %1326 = vmatmul.mubr.bf16.gmra.mrb[0].mxu0 %v1288
        %v1327 = vpop.f32.mrb[0].mxu0
        %v1328 = vadd.f32 %v1275, %v1327
        %v1329 = vpop.f32.mrb[0].mxu0
        %v1330 = vpop.f32.mrb[0].mxu0
        %v1331 = vadd.f32 %v1280, %v1330
        %v1332 = vpop.f32.mrb[0].mxu0
        %1333 = vdwg.mxu0
        %v1334 = vunpack.c.l.bf16 %v571
        %v1335 = vunpack.c.l.bf16 %v572
        %v1336 = vadd.f32 %v1328, %v1334
        %v1337 = vadd.f32 %v1331, %v1335
        %v1338 = vmax.f32 %v1336, 0.0
        %v1339 = vmax.f32 %v1337, 0.0
        %v1340 = vpack.c.bf16 %v1339, %v1338
        %v1342 = vunpack.c.l.b16 %v1340
        %v1343 = vunpack.c.h.b16 %v1340
        %v1344 = vpack.c.b16 %v1342, %v1342
        %v1345 = vpack.c.b16 %v1343, %v1343
        %1348 = vst [vmem:[%s563] sm:$0xf] %v1344
        %1349 = vst [vmem:[%s563 + $0x4] sm:$0xf] %v1345
        %s1350 = sand.u32 %s293, 1
        %s1351 = scalar_lea.sflag [#allocation4], %s1350
        %s1352 = sand.u32 %s293, 1
        %s1353 = smul.addr %s1352, 8
        %s1354 = scalar_lea.vmem [#allocation9], %s1353
        // Predicated region
        $region151: #{tpu_custom_call.1} parent=133 // pred_check
          %p1355 = pneg %p303
        $region152: #{tpu_custom_call.1} parent=133 // pred_check_branch
          %1357 = sbr.rel (%p1355) target = $region154
        $region153: #{tpu_custom_call.1} parent=133 // pred_region
          %s1359 = ssub.s32 128, 128
          %1360 = vsyncadd %s1351, %s1359
          %s1361 = smul.addr %s32, 4
          %s1362 = sadd.s32 %s33, %s1361
          %s1363 = smul.addr %s1362, 64
          %s1364 = scalar_lea.hbm %s10, %s1363
          %s1365 = sshll.u32 %s1354, 4
          %s1366 = int_to_ptr.vmem [resolvable:$true] %s1365
          %1371 = dma.vmem_to_hbm [thread:$0]  %s1366, 128, %s1364, %s1351, 64, 128, 4
        $region154: #{tpu_custom_call.1} parent=133 // pred_fallthru
          _
      $region134: #{tpu_custom_call.1} parent=5 // pred_fallthru
        _
      %p1372 = scmp.le.s32.totalorder 2, %s23
      // Predicated region
      $region155: #{tpu_custom_call.1} parent=5 // pred_check
        %p1373 = pneg %p1372
      $region156: #{tpu_custom_call.1} parent=5 // pred_check_branch
        %1375 = sbr.rel (%p1373) target = $region158
      $region157: #{tpu_custom_call.1} parent=5 // pred_region
        %s1376 = ssub.s32 %s23, 2
        // Predicated region
        $region159: #{tpu_custom_call.1} parent=157 // pred_check
          %p1377 = pneg %p309
        $region160: #{tpu_custom_call.1} parent=157 // pred_check_branch
          %1379 = sbr.rel (%p1377) target = $region162
        $region161: #{tpu_custom_call.1} parent=157 // pred_region
          %s1380 = sand.u32 %s294, 1
          %s1381 = scalar_lea.sflag [#allocation4], %s1380
          %s1382 = sand.u32 %s294, 1
          %s1383 = smul.addr %s1382, 8
          %s1384 = scalar_lea.vmem [#allocation9], %s1383
          %1385 = dma.done %s1381, 128
        $region162: #{tpu_custom_call.1} parent=157 // pred_fallthru
          _
      $region158: #{tpu_custom_call.1} parent=5 // pred_fallthru
        _
    $region6: #{tpu_custom_call.1} parent=1 // loop_footer
      %s27 = sadd.s32 1, %s23
    $region7: #{tpu_custom_call.1} parent=1 // loop_footer_branch
      %22 = sbr.rel target = $region3
    $region8: #{tpu_custom_call.1} parent=1 // loop_exit
      _
    %1386 = vsyncpa [#allocation3], 1
    %s1387 = scalar_lea.sflag [#allocation3], 1
    %1388 = vsyncpa %s1387, 1
    %1389 = vsyncpa [#allocation8], 1
    %s1390 = scalar_lea.sflag [#allocation8], 1
    %1391 = vsyncpa %s1390, 1
    %1392 = vsyncpa [#allocation4], 1
    %s1393 = scalar_lea.sflag [#allocation4], 1
    %1394 = vsyncpa %s1393, 1

</llo_original>
